<compile_context>
chip_gen: v5e
topology: v5e:2x2
jax: 0.10.0
libtpu: 0.0.40
codegen_flags: <defaults>
</compile_context>

<pallas_src>
import jax
import jax.numpy as jnp
from jax.experimental import pallas as pl
from jax.experimental.pallas import tpu as pltpu

BN_EPS = 1e-5
LANE = 128
SUBLANE = 8


def _round_up(x, m):
    return (x + m - 1) // m * m


# --------- pass 1: 3x3 conv (im2col fused, taps folded into K) + BN partials --------

def _conv_stats_kernel(xh_ref, w_ref, y_ref, stats_ref):
    # xh_ref:    (TH+2, Wp, Cin_p)   zero-padded, haloed input row tile (one image)
    # w_ref:     (9*Cin_p, TN)       conv weights, 3x3 taps folded into K
    # y_ref:     (TH, W, TN)         conv output tile (f32, lane-dense channels)
    # stats_ref: (2, TN)             per-tile [sum, sum_of_squares] over (TH, W)
    TH, W, TN = y_ref.shape
    Cin_p = xh_ref.shape[-1]

    # Fused im2col: gather the 9 shifted windows and fold them into the contraction
    # dim so one (TH*W, 9*Cin_p) @ (9*Cin_p, TN) matmul covers the whole row tile
    # (large M and K -> high MXU occupancy, 9x fewer MXU passes than per-tap dots).
    cols = []
    for kh in range(3):
        for kw in range(3):
            cols.append(xh_ref[kh:kh + TH, kw:kw + W, :])       # (TH, W, Cin_p)
    lhs = jnp.concatenate(cols, axis=-1).reshape(TH * W, 9 * Cin_p)

    y2 = jnp.dot(lhs, w_ref[...], preferred_element_type=jnp.float32)   # (TH*W, TN)
    y_ref[...] = y2.reshape(TH, W, TN).astype(y_ref.dtype)
    stats_ref[0:1, :] = jnp.sum(y2, axis=0, keepdims=True)
    stats_ref[1:2, :] = jnp.sum(y2 * y2, axis=0, keepdims=True)


# --------- pass 2: fused BN scale/shift + ReLU + channel-slice + NHWC->NCHW ---------

def _bn_relu_t_kernel(y_ref, scale_ref, shift_ref, o_ref):
    # y_ref: (TM, Cout_p), scale/shift: (1, Cout_p), o_ref: (Cout_r, TM)
    z = jnp.maximum(y_ref[...] * scale_ref[...] + shift_ref[...], 0.0)
    zt = jnp.transpose(z)                       # XLU transpose (free slot in this pass)
    o_ref[...] = zt[0:o_ref.shape[0], :].astype(o_ref.dtype)


# ----------------------------------- tile pickers -----------------------------------

def _pick_row_tile(H, W, Wp, Cin_p, TN, budget=10 * 1024 * 1024):
    """Largest H row-tile that divides H, keeps M = TH*W sane and fits VMEM budget."""
    best = 1
    for th in range(1, H + 1):
        if H % th:
            continue
        if th * W > 4096:                    # cap the matmul M dim / im2col slab
            continue
        est = 4 * (2 * (th + 2) * Wp * Cin_p      # haloed input tile (double-buffered)
                   + 2 * th * W * TN              # conv output tile (double-buffered)
                   + 3 * th * W * 9 * Cin_p       # im2col value + relayout temps
                   + 2 * 9 * Cin_p * TN)          # weight tile
        if est <= budget:
            best = th
    return best


def _pick_m_tile(HW, Cout_p, budget=8 * 1024 * 1024):
    """Largest multiple-of-128 divisor of HW under budget (full HW as fallback)."""
    best = None
    for tm in range(128, min(HW, 4096) + 1, 128):
        if HW % tm:
            continue
        if 4 * (4 * tm * Cout_p) <= budget:
            best = tm
    if best is None:
        # TODO(synk): for huge H*W with no multiple-of-128 divisor, use cdiv + a
        # masked tail tile instead of whole-row blocks.
        best = HW
    return best


# --------------------------------------- forward ------------------------------------

def conv_bn_relu(x_nchw, conv_weight, bn_gamma, bn_beta, *, ks=3, stride=1, padding=1):
    """Forward of ConvBNReLU.  x: (N, Cin, H, W) -> (N, Cout, H, W)."""
    assert ks == 3 and stride == 1 and padding == 1, "kernel implements the module defaults"
    N, Cin, H, W = x_nchw.shape
    Cout = conv_weight.shape[0]
    f32 = jnp.float32

    Cin_p = _round_up(Cin, SUBLANE)        # sublane-aligned contraction channels
    Cout_p = _round_up(Cout, LANE)         # lane-dense conv-output channels
    Cout_r = _round_up(Cout, SUBLANE)      # sublane-aligned NCHW output channels
    TN = Cout_p if Cout_p <= 512 else LANE
    n_co = Cout_p // TN
    Hp, Wp = H + 2 * padding, W + 2 * padding

    TH = _pick_row_tile(H, W, Wp, Cin_p, TN)
    n_h = H // TH

    # --- glue: NCHW -> zero-padded NHWC, split into overlapping (halo=1) row tiles ---
    x_nhwc = jnp.transpose(x_nchw, (0, 2, 3, 1)).astype(f32)
    xp = jnp.pad(x_nhwc, ((0, 0), (padding, padding), (padding, padding),
                          (0, Cin_p - Cin)))
    row_idx = jnp.arange(n_h)[:, None] * TH + jnp.arange(TH + 2)[None, :]
    xh = xp[:, row_idx]                    # (N, n_h, TH+2, Wp, Cin_p)

    # torch weight (Cout, Cin, kh, kw) -> (kh, kw, Cin_p, Cout_p) -> (9*Cin_p, Cout_p)
    w = jnp.transpose(conv_weight.astype(f32), (2, 3, 1, 0))
    w = jnp.pad(w, ((0, 0), (0, 0), (0, Cin_p - Cin), (0, Cout_p - Cout)))
    w = w.reshape(ks * ks * Cin_p, Cout_p)
    # TODO(synk): bf16 matmul operands (f32 accumulate) would ~3x MXU throughput on
    # v6e/v7x but can exceed the 1e-3 self-test tolerance, so operands stay f32.

    vmem1 = int(min(max(
        4 * 4 * (2 * (TH + 2) * Wp * Cin_p + 2 * TH * W * TN
                 + 3 * TH * W * 9 * Cin_p + 2 * 9 * Cin_p * TN),
        32 << 20), 60 << 20))
    ce1 = pl.CostEstimate(
        flops=2 * N * H * W * 9 * Cin_p * Cout_p,
        transcendentals=0,
        bytes_accessed=4 * (xh.size + w.size + N * H * W * Cout_p + N * n_h * 2 * Cout_p))

    # --- pass 1: conv with fused im2col + per-tile BN partial sums ---
    y, stats = pl.pallas_call(
        _conv_stats_kernel,
        out_shape=(
            jax.ShapeDtypeStruct((N, H, W, Cout_p), f32),
            jax.ShapeDtypeStruct((N, n_h, 2, Cout_p), f32),
        ),
        grid=(N, n_h, n_co),
        in_specs=[
            pl.BlockSpec((None, None, TH + 2, Wp, Cin_p),
                         lambda n, h, co: (n, h, 0, 0, 0)),
            pl.BlockSpec((ks * ks * Cin_p, TN), lambda n, h, co: (0, co)),
        ],
        out_specs=(
            pl.BlockSpec((None, TH, W, TN), lambda n, h, co: (n, h, 0, co)),
            pl.BlockSpec((None, None, 2, TN), lambda n, h, co: (n, h, 0, co)),
        ),
        compiler_params=pltpu.CompilerParams(
            dimension_semantics=("parallel", "parallel", "parallel"),
            vmem_limit_bytes=vmem1),
        cost_estimate=ce1,
    )(xh, w)

    # --- tiny BN finalize (per-channel scalars only) ---
    m_count = float(N * H * W)
    sum_c = jnp.sum(stats[:, :, 0, :], axis=(0, 1))
    sumsq_c = jnp.sum(stats[:, :, 1, :], axis=(0, 1))
    mean = sum_c / m_count
    # TODO(synk): E[x^2]-E[x]^2 can cancel for large-|mean| channels; switch to a
    # shifted / two-pass variance if tighter accuracy is needed at scale.
    var = jnp.maximum(sumsq_c / m_count - mean * mean, 0.0)   # biased train-mode var
    inv_std = jax.lax.rsqrt(var + BN_EPS)
    gamma_p = jnp.pad(bn_gamma.astype(f32), (0, Cout_p - Cout))
    beta_p = jnp.pad(bn_beta.astype(f32), (0, Cout_p - Cout))
    scale = (gamma_p * inv_std).reshape(1, Cout_p)
    shift = (beta_p - mean * gamma_p * inv_std).reshape(1, Cout_p)
    # TODO(synk): running_mean/running_var momentum update (training-state side effect
    # of nn.BatchNorm2d) is not reproduced; it does not affect the output.

    # --- pass 2: fused scale/shift + ReLU + channel-slice + NHWC->NCHW transpose ---
    HW = H * W
    TM = _pick_m_tile(HW, Cout_p)
    y_flat = y.reshape(N, HW, Cout_p)

    vmem2 = int(min(max(4 * 4 * (2 * TM * Cout_p + 2 * Cout_r * TM + 2 * Cout_p),
                        32 << 20), 60 << 20))
    ce2 = pl.CostEstimate(
        flops=2 * N * HW * Cout_p,
        transcendentals=0,
        bytes_accessed=4 * (N * HW * Cout_p + N * Cout_r * HW + 2 * Cout_p))

    out3 = pl.pallas_call(
        _bn_relu_t_kernel,
        out_shape=jax.ShapeDtypeStruct((N, Cout_r, HW), f32),
        grid=(N, HW // TM),
        in_specs=[
            pl.BlockSpec((None, TM, Cout_p), lambda n, m: (n, m, 0)),
            pl.BlockSpec((1, Cout_p), lambda n, m: (0, 0)),
            pl.BlockSpec((1, Cout_p), lambda n, m: (0, 0)),
        ],
        out_specs=pl.BlockSpec((None, Cout_r, TM), lambda n, m: (n, 0, m)),
        compiler_params=pltpu.CompilerParams(
            dimension_semantics=("parallel", "parallel"),
            vmem_limit_bytes=vmem2),
        cost_estimate=ce2,
    )(y_flat, scale, shift)

    out = out3 if Cout_r == Cout else out3[:, :Cout, :]
    return out.reshape(N, Cout, H, W).astype(x_nchw.dtype)


def _reference(x_nchw, conv_weight, bn_gamma, bn_beta):
    """Plain-JAX reference (conv_general_dilated + train-mode BN + ReLU)."""
    y = jax.lax.conv_general_dilated(
        x_nchw.astype(jnp.float32), conv_weight.astype(jnp.float32),
        window_strides=(1, 1), padding=((1, 1), (1, 1)),
        dimension_numbers=("NCHW", "OIHW", "NCHW"))
    mean = jnp.mean(y, axis=(0, 2, 3), keepdims=True)
    var = jnp.mean((y - mean) ** 2, axis=(0, 2, 3), keepdims=True)
    y_hat = (y - mean) * jax.lax.rsqrt(var + BN_EPS)
    out = y_hat * bn_gamma.reshape(1, -1, 1, 1) + bn_beta.reshape(1, -1, 1, 1)
    return jnp.maximum(out, 0.0)


if __name__ == "__main__":
    key = jax.random.PRNGKey(0)
    k_x, k_w, k_g, k_b = jax.random.split(key, 4)

    N, Cin, H, W = 2, 4, 16, 16
    Cout, ks = 8, 3

    x = jax.random.normal(k_x, (N, Cin, H, W), dtype=jnp.float32)
    conv_w = jax.random.normal(k_w, (Cout, Cin, ks, ks), dtype=jnp.float32) * 0.1
    gamma = 1.0 + 0.1 * jax.random.normal(k_g, (Cout,), dtype=jnp.float32)
    beta = 0.1 * jax.random.normal(k_b, (Cout,), dtype=jnp.float32)

    fwd = jax.jit(conv_bn_relu)
    out = jax.block_until_ready(fwd(x, conv_w, gamma, beta))

    ref = jax.block_until_ready(_reference(x, conv_w, gamma, beta))
    assert out.shape == (N, Cout, H, W)
    assert jnp.max(jnp.abs(out - ref)) < 1e-3, "mismatch vs reference"

    print("KERNEL_OK")
</pallas_src>

<mosaic_0001>
module attributes {stable_mosaic.version = 11 : i64} {
  func.func @_bn_relu_t_kernel(%arg0: i32, %arg1: i32, %arg2: memref<1x256x128xf32, #tpu.memory_space<vmem>>, %arg3: memref<1x128xf32, #tpu.memory_space<vmem>>, %arg4: memref<1x128xf32, #tpu.memory_space<vmem>>, %arg5: memref<1x8x256xf32, #tpu.memory_space<vmem>>) attributes {dimension_semantics = [#tpu.dimension_semantics<parallel>, #tpu.dimension_semantics<parallel>], iteration_bounds = array<i64: 2, 1>, scalar_prefetch = 0 : i64, scratch_operands = 0 : i64, tpu.core_type = #tpu.core_type<tc>, window_params = [{transform_indices = @transform_0, window_bounds = array<i64: 1, 256, 128>}, {pipeline_mode = #tpu.pipeline_mode<synchronous>, transform_indices = @transform_1, window_bounds = array<i64: 1, 128>}, {pipeline_mode = #tpu.pipeline_mode<synchronous>, transform_indices = @transform_2, window_bounds = array<i64: 1, 128>}, {transform_indices = @transform_3, window_bounds = array<i64: 1, 8, 256>}]} {
    %c0 = arith.constant 0 : index
    %c0_0 = arith.constant 0 : index
    %c0_1 = arith.constant 0 : index
    %0 = vector.load %arg2[%c0, %c0_0, %c0_1] : memref<1x256x128xf32, #tpu.memory_space<vmem>>, vector<1x256x128xf32>
    %1 = vector.shape_cast %0 : vector<1x256x128xf32> to vector<256x128xf32>
    %c0_2 = arith.constant 0 : index
    %c0_3 = arith.constant 0 : index
    %2 = vector.load %arg3[%c0_2, %c0_3] : memref<1x128xf32, #tpu.memory_space<vmem>>, vector<1x128xf32>
    %3 = vector.broadcast %2 : vector<1x128xf32> to vector<256x128xf32>
    %4 = arith.mulf %1, %3 : vector<256x128xf32>
    %c0_4 = arith.constant 0 : index
    %c0_5 = arith.constant 0 : index
    %5 = vector.load %arg4[%c0_4, %c0_5] : memref<1x128xf32, #tpu.memory_space<vmem>>, vector<1x128xf32>
    %6 = vector.broadcast %5 : vector<1x128xf32> to vector<256x128xf32>
    %7 = arith.addf %4, %6 : vector<256x128xf32>
    %cst = arith.constant 0.000000e+00 : f32
    %8 = vector.broadcast %cst : f32 to vector<256x128xf32>
    %9 = arith.maximumf %7, %8 : vector<256x128xf32>
    %10 = tpu.transpose %9, [1, 0] : vector<256x128xf32> -> vector<128x256xf32>
    %11 = vector.extract_strided_slice %10 {offsets = [0, 0], sizes = [8, 256], strides = [1, 1]} : vector<128x256xf32> to vector<8x256xf32>
    %c0_6 = arith.constant 0 : index
    %c0_7 = arith.constant 0 : index
    %c0_8 = arith.constant 0 : index
    %12 = vector.load %arg5[%c0_6, %c0_7, %c0_8] : memref<1x8x256xf32, #tpu.memory_space<vmem>>, vector<1x8x256xf32>
    %13 = vector.shape_cast %12 : vector<1x8x256xf32> to vector<8x256xf32>
    %14 = vector.shape_cast %11 : vector<8x256xf32> to vector<1x8x256xf32>
    tpu.vector_store %arg5[%c0_6, %c0_7, %c0_8], %14 {strides = array<i32>} : memref<1x8x256xf32, #tpu.memory_space<vmem>>, vector<1x8x256xf32>,
    return
  }
  func.func @transform_0(%arg0: i32, %arg1: i32) -> (i32, i32, i32) {
    %c0_i32 = arith.constant 0 : i32
    %c0_i32_0 = arith.constant 0 : i32
    return %arg0, %arg1, %c0_i32 : i32, i32, i32
  }
  func.func @transform_1(%arg0: i32, %arg1: i32) -> (i32, i32) {
    %c0_i32 = arith.constant 0 : i32
    %c0_i32_0 = arith.constant 0 : i32
    %c0_i32_1 = arith.constant 0 : i32
    return %c0_i32, %c0_i32_0 : i32, i32
  }
  func.func @transform_2(%arg0: i32, %arg1: i32) -> (i32, i32) {
    %c0_i32 = arith.constant 0 : i32
    %c0_i32_0 = arith.constant 0 : i32
    %c0_i32_1 = arith.constant 0 : i32
    return %c0_i32, %c0_i32_0 : i32, i32
  }
  func.func @transform_3(%arg0: i32, %arg1: i32) -> (i32, i32, i32) {
    %c0_i32 = arith.constant 0 : i32
    %c0_i32_0 = arith.constant 0 : i32
    return %arg0, %c0_i32, %arg1 : i32, i32, i32
  }
}

module attributes {stable_mosaic.version = 11 : i64} {
  func.func @_conv_stats_kernel(%arg0: i32, %arg1: i32, %arg2: i32, %arg3: memref<1x1x18x18x8xf32, #tpu.memory_space<vmem>>, %arg4: memref<72x128xf32, #tpu.memory_space<vmem>>, %arg5: memref<1x16x16x128xf32, #tpu.memory_space<vmem>>, %arg6: memref<1x1x2x128xf32, #tpu.memory_space<vmem>>) attributes {dimension_semantics = [#tpu.dimension_semantics<parallel>, #tpu.dimension_semantics<parallel>, #tpu.dimension_semantics<parallel>], iteration_bounds = array<i64: 2, 1, 1>, scalar_prefetch = 0 : i64, scratch_operands = 0 : i64, tpu.core_type = #tpu.core_type<tc>, window_params = [{transform_indices = @transform_0, window_bounds = array<i64: 1, 1, 18, 18, 8>}, {transform_indices = @transform_1, window_bounds = array<i64: 72, 128>}, {transform_indices = @transform_2, window_bounds = array<i64: 1, 16, 16, 128>}, {transform_indices = @transform_3, window_bounds = array<i64: 1, 1, 2, 128>}]} {
    %c0 = arith.constant 0 : index
    %c0_0 = arith.constant 0 : index
    %c0_1 = arith.constant 0 : index
    %c0_2 = arith.constant 0 : index
    %c0_3 = arith.constant 0 : index
    %0 = vector.load %arg3[%c0, %c0_0, %c0_1, %c0_2, %c0_3] : memref<1x1x18x18x8xf32, #tpu.memory_space<vmem>>, vector<1x1x16x16x8xf32>
    %1 = vector.shape_cast %0 : vector<1x1x16x16x8xf32> to vector<16x16x8xf32>
    %c0_4 = arith.constant 0 : index
    %c0_5 = arith.constant 0 : index
    %c0_6 = arith.constant 0 : index
    %c1 = arith.constant 1 : index
    %c0_7 = arith.constant 0 : index
    %2 = vector.load %arg3[%c0_4, %c0_5, %c0_6, %c1, %c0_7] : memref<1x1x18x18x8xf32, #tpu.memory_space<vmem>>, vector<1x1x16x16x8xf32>
    %3 = vector.shape_cast %2 : vector<1x1x16x16x8xf32> to vector<16x16x8xf32>
    %c0_8 = arith.constant 0 : index
    %c0_9 = arith.constant 0 : index
    %c0_10 = arith.constant 0 : index
    %c2 = arith.constant 2 : index
    %c0_11 = arith.constant 0 : index
    %4 = vector.load %arg3[%c0_8, %c0_9, %c0_10, %c2, %c0_11] : memref<1x1x18x18x8xf32, #tpu.memory_space<vmem>>, vector<1x1x16x16x8xf32>
    %5 = vector.shape_cast %4 : vector<1x1x16x16x8xf32> to vector<16x16x8xf32>
    %c0_12 = arith.constant 0 : index
    %c0_13 = arith.constant 0 : index
    %c1_14 = arith.constant 1 : index
    %c0_15 = arith.constant 0 : index
    %c0_16 = arith.constant 0 : index
    %6 = vector.load %arg3[%c0_12, %c0_13, %c1_14, %c0_15, %c0_16] : memref<1x1x18x18x8xf32, #tpu.memory_space<vmem>>, vector<1x1x16x16x8xf32>
    %7 = vector.shape_cast %6 : vector<1x1x16x16x8xf32> to vector<16x16x8xf32>
    %c0_17 = arith.constant 0 : index
    %c0_18 = arith.constant 0 : index
    %c1_19 = arith.constant 1 : index
    %c1_20 = arith.constant 1 : index
    %c0_21 = arith.constant 0 : index
    %8 = vector.load %arg3[%c0_17, %c0_18, %c1_19, %c1_20, %c0_21] : memref<1x1x18x18x8xf32, #tpu.memory_space<vmem>>, vector<1x1x16x16x8xf32>
    %9 = vector.shape_cast %8 : vector<1x1x16x16x8xf32> to vector<16x16x8xf32>
    %c0_22 = arith.constant 0 : index
    %c0_23 = arith.constant 0 : index
    %c1_24 = arith.constant 1 : index
    %c2_25 = arith.constant 2 : index
    %c0_26 = arith.constant 0 : index
    %10 = vector.load %arg3[%c0_22, %c0_23, %c1_24, %c2_25, %c0_26] : memref<1x1x18x18x8xf32, #tpu.memory_space<vmem>>, vector<1x1x16x16x8xf32>
    %11 = vector.shape_cast %10 : vector<1x1x16x16x8xf32> to vector<16x16x8xf32>
    %c0_27 = arith.constant 0 : index
    %c0_28 = arith.constant 0 : index
    %c2_29 = arith.constant 2 : index
    %c0_30 = arith.constant 0 : index
    %c0_31 = arith.constant 0 : index
    %12 = vector.load %arg3[%c0_27, %c0_28, %c2_29, %c0_30, %c0_31] : memref<1x1x18x18x8xf32, #tpu.memory_space<vmem>>, vector<1x1x16x16x8xf32>
    %13 = vector.shape_cast %12 : vector<1x1x16x16x8xf32> to vector<16x16x8xf32>
    %c0_32 = arith.constant 0 : index
    %c0_33 = arith.constant 0 : index
    %c2_34 = arith.constant 2 : index
    %c1_35 = arith.constant 1 : index
    %c0_36 = arith.constant 0 : index
    %14 = vector.load %arg3[%c0_32, %c0_33, %c2_34, %c1_35, %c0_36] : memref<1x1x18x18x8xf32, #tpu.memory_space<vmem>>, vector<1x1x16x16x8xf32>
    %15 = vector.shape_cast %14 : vector<1x1x16x16x8xf32> to vector<16x16x8xf32>
    %c0_37 = arith.constant 0 : index
    %c0_38 = arith.constant 0 : index
    %c2_39 = arith.constant 2 : index
    %c2_40 = arith.constant 2 : index
    %c0_41 = arith.constant 0 : index
    %16 = vector.load %arg3[%c0_37, %c0_38, %c2_39, %c2_40, %c0_41] : memref<1x1x18x18x8xf32, #tpu.memory_space<vmem>>, vector<1x1x16x16x8xf32>
    %17 = vector.shape_cast %16 : vector<1x1x16x16x8xf32> to vector<16x16x8xf32>
    %18 = tpu.concatenate %1, %3, %5, %7, %9, %11, %13, %15, %17 in 2 : vector<16x16x8xf32>, vector<16x16x8xf32>, vector<16x16x8xf32>, vector<16x16x8xf32>, vector<16x16x8xf32>, vector<16x16x8xf32>, vector<16x16x8xf32>, vector<16x16x8xf32>, vector<16x16x8xf32> -> vector<16x16x72xf32>
    %19 = vector.shape_cast %18 : vector<16x16x72xf32> to vector<256x72xf32>
    %c0_42 = arith.constant 0 : index
    %c0_43 = arith.constant 0 : index
    %20 = vector.load %arg4[%c0_42, %c0_43] : memref<72x128xf32, #tpu.memory_space<vmem>>, vector<72x128xf32>
    %cst = arith.constant dense<0.000000e+00> : vector<256x128xf32>
    %21 = tpu.matmul %19, %20, %cst {dimension_numbers = #tpu.dot_dimension_numbers<[1], [0], [0], [1], [0, 0, 1, 1], [], []>} : vector<256x72xf32>, vector<72x128xf32>, vector<256x128xf32> -> vector<256x128xf32>
    %22 = vector.shape_cast %21 : vector<256x128xf32> to vector<16x16x128xf32>
    %c0_44 = arith.constant 0 : index
    %c0_45 = arith.constant 0 : index
    %c0_46 = arith.constant 0 : index
    %c0_47 = arith.constant 0 : index
    %23 = vector.load %arg5[%c0_44, %c0_45, %c0_46, %c0_47] : memref<1x16x16x128xf32, #tpu.memory_space<vmem>>, vector<1x16x16x128xf32>
    %24 = vector.shape_cast %23 : vector<1x16x16x128xf32> to vector<16x16x128xf32>
    %25 = vector.shape_cast %22 : vector<16x16x128xf32> to vector<1x16x16x128xf32>
    tpu.vector_store %arg5[%c0_44, %c0_45, %c0_46, %c0_47], %25 {strides = array<i32>} : memref<1x16x16x128xf32, #tpu.memory_space<vmem>>, vector<1x16x16x128xf32>,
    %cst_48 = arith.constant dense<0.000000e+00> : vector<128xf32>
    %26 = vector.multi_reduction <add>, %21, %cst_48 [0] : vector<256x128xf32> to vector<128xf32>
    %27 = vector.shape_cast %26 : vector<128xf32> to vector<1x128xf32>
    %c0_49 = arith.constant 0 : index
    %c0_50 = arith.constant 0 : index
    %c0_51 = arith.constant 0 : index
    %c0_52 = arith.constant 0 : index
    %28 = vector.load %arg6[%c0_49, %c0_50, %c0_51, %c0_52] : memref<1x1x2x128xf32, #tpu.memory_space<vmem>>, vector<1x1x1x128xf32>
    %29 = vector.shape_cast %28 : vector<1x1x1x128xf32> to vector<1x128xf32>
    %30 = vector.shape_cast %27 : vector<1x128xf32> to vector<1x1x1x128xf32>
    tpu.vector_store %arg6[%c0_49, %c0_50, %c0_51, %c0_52], %30 {strides = array<i32>} : memref<1x1x2x128xf32, #tpu.memory_space<vmem>>, vector<1x1x1x128xf32>,
    %31 = arith.mulf %21, %21 : vector<256x128xf32>
    %cst_53 = arith.constant dense<0.000000e+00> : vector<128xf32>
    %32 = vector.multi_reduction <add>, %31, %cst_53 [0] : vector<256x128xf32> to vector<128xf32>
    %33 = vector.shape_cast %32 : vector<128xf32> to vector<1x128xf32>
    %c0_54 = arith.constant 0 : index
    %c0_55 = arith.constant 0 : index
    %c1_56 = arith.constant 1 : index
    %c0_57 = arith.constant 0 : index
    %34 = vector.load %arg6[%c0_54, %c0_55, %c1_56, %c0_57] : memref<1x1x2x128xf32, #tpu.memory_space<vmem>>, vector<1x1x1x128xf32>
    %35 = vector.shape_cast %34 : vector<1x1x1x128xf32> to vector<1x128xf32>
    %36 = vector.shape_cast %33 : vector<1x128xf32> to vector<1x1x1x128xf32>
    tpu.vector_store %arg6[%c0_54, %c0_55, %c1_56, %c0_57], %36 {strides = array<i32>} : memref<1x1x2x128xf32, #tpu.memory_space<vmem>>, vector<1x1x1x128xf32>,
    return
  }
  func.func @transform_0(%arg0: i32, %arg1: i32, %arg2: i32) -> (i32, i32, i32, i32, i32) {
    %c0_i32 = arith.constant 0 : i32
    %c0_i32_0 = arith.constant 0 : i32
    %c0_i32_1 = arith.constant 0 : i32
    %c0_i32_2 = arith.constant 0 : i32
    return %arg0, %arg1, %c0_i32, %c0_i32_0, %c0_i32_1 : i32, i32, i32, i32, i32
  }
  func.func @transform_1(%arg0: i32, %arg1: i32, %arg2: i32) -> (i32, i32) {
    %c0_i32 = arith.constant 0 : i32
    %c0_i32_0 = arith.constant 0 : i32
    return %c0_i32, %arg2 : i32, i32
  }
  func.func @transform_2(%arg0: i32, %arg1: i32, %arg2: i32) -> (i32, i32, i32, i32) {
    %c0_i32 = arith.constant 0 : i32
    %c0_i32_0 = arith.constant 0 : i32
    return %arg0, %arg1, %c0_i32, %arg2 : i32, i32, i32, i32
  }
  func.func @transform_3(%arg0: i32, %arg1: i32, %arg2: i32) -> (i32, i32, i32, i32) {
    %c0_i32 = arith.constant 0 : i32
    %c0_i32_0 = arith.constant 0 : i32
    return %arg0, %arg1, %c0_i32, %arg2 : i32, i32, i32, i32
  }
}

</mosaic_0001>

<llo_original>
// kernel: conv_bn_relu.3
$region0: #{conv_bn_relu.3}
  #allocation0 [shape = 'u32[]', space=smem, size = 0x4, offset = 0x4, fixed_abs, tag = 'smem constant byte address 0x4 - core index']
  #allocation1 [shape = 'u32[72,128]{1,0:T(1,128)}', space=vmem, size = 0x9000, scoped, tag = 'internal scratch']
  %s0 = inlined_call_operand.vmem [shape: f32[2,256,128], index: 0, kind: input, shape index: {}]
  %s1 = inlined_call_operand.vmem [shape: f32[1,128], index: 1, kind: input, shape index: {}]
  %s2 = inlined_call_operand.vmem [shape: f32[1,128], index: 2, kind: input, shape index: {}]
  %s3 = inlined_call_operand.vmem [shape: f32[2,8,256], index: 3, kind: output, shape index: {}]
  %s4 = sld [smem:[#allocation0]]
  $region45: #{conv_bn_relu.3} parent=0
    _
  %s6 = ssub.s32 1, %s4
  %s7 = scalar_select 0, %s6, %s4
  loop: start=0, step=1, limit=4
  $region2: #{conv_bn_relu.3} parent=0 // loop_pre_header
    _
  $region3: #{conv_bn_relu.3} parent=0 // loop_header
    %s9 = sphi 0, %s13
    %p10 = scmp.ge.s32.totalorder %s9, 4
    %s16 = sphi 0, %s28
    %s17 = sphi 0, %s24
    %s18 = sphi 0, %s16
    %s19 = sphi 0, %s17
    %s20 = sphi 0, %s18
    %s21 = sphi 0, %s19
    %s33 = sphi 0, %s35
    %s36 = sphi 0, %s33
    %s37 = sphi 0, %s36
    %s53 = sphi 0, %s37
    %s57 = sphi 0, %s57
    %s59 = sphi 0, %s57
    %s60 = sphi 0, %s59
    %s74 = sphi 0, %s60
    %s78 = sphi 0, %s78
    %s80 = sphi 0, %s78
    %s81 = sphi 0, %s80
    %s95 = sphi 0, %s81
    %s103 = sphi 0, %s105
    %s106 = sphi 0, %s103
    %s107 = sphi 0, %s106
    %s123 = sphi 0, %s107
  $region4: #{conv_bn_relu.3} parent=0 // loop_header_branch
    %12 = sbr.rel (%p10) target = $region8
  $region5: #{conv_bn_relu.3} parent=0 // loop_body
    %s14 = ssub.s32 %s9, 1
    %s15 = ssub.s32 %s9, 2
    %s22 = sadd.s32 1, %s17
    %p23 = scmp.ge.s32.totalorder %s22, 1
    %s24 = scalar_select %p23, 0, %s22
    %s25 = sadd.s32 1, %s16
    %s26 = scalar_select %p23, %s25, %s16
    %p27 = scmp.ge.s32.totalorder %s26, 2
    %s28 = scalar_select %p27, 0, %s26
    %s29 = ssub.s32 %s16, %s28
    %s30 = ssub.s32 %s17, %s24
    %s31 = sor.u32 %s29, %s30
    %p32 = scmp.eq.s32.totalorder %s31, 0
    %s34 = sadd.s32 %s33, 1
    %s35 = scalar_select %p32, %s33, %s34
    %p38 = pneg %p32
    %p39 = scmp.eq.s32.totalorder %s9, 1
    %p40 = por %p38, %p39
    %p41 = scmp.ne.s32.totalorder %s33, %s36
    %p42 = scmp.eq.s32.totalorder %s9, 0
    %p43 = por %p41, %p42
    %p44 = scmp.ne.s32.totalorder %s33, %s36
    %p45 = scmp.eq.s32.totalorder %s14, 1
    %p46 = por %p44, %p45
    %p47 = scmp.ne.s32.totalorder %s36, %s37
    %p48 = scmp.eq.s32.totalorder %s14, 0
    %p49 = por %p47, %p48
    %p50 = scmp.ne.s32.totalorder %s36, %s37
    %p51 = scmp.eq.s32.totalorder %s15, 1
    %p52 = por %p50, %p51
    %p54 = scmp.ne.s32.totalorder %s37, %s53
    %p55 = scmp.eq.s32.totalorder %s15, 0
    %p56 = por %p54, %p55
    %s58 = sadd.s32 %s57, 1
    %p61 = scmp.eq.s32.totalorder %s9, 1
    %p62 = scmp.ne.s32.totalorder %s57, %s59
    %p63 = scmp.eq.s32.totalorder %s9, 0
    %p64 = por %p62, %p63
    %p65 = scmp.ne.s32.totalorder %s57, %s59
    %p66 = scmp.eq.s32.totalorder %s14, 1
    %p67 = por %p65, %p66
    %p68 = scmp.ne.s32.totalorder %s59, %s60
    %p69 = scmp.eq.s32.totalorder %s14, 0
    %p70 = por %p68, %p69
    %p71 = scmp.ne.s32.totalorder %s59, %s60
    %p72 = scmp.eq.s32.totalorder %s15, 1
    %p73 = por %p71, %p72
    %p75 = scmp.ne.s32.totalorder %s60, %s74
    %p76 = scmp.eq.s32.totalorder %s15, 0
    %p77 = por %p75, %p76
    %s79 = sadd.s32 %s78, 1
    %p82 = scmp.eq.s32.totalorder %s9, 1
    %p83 = scmp.ne.s32.totalorder %s78, %s80
    %p84 = scmp.eq.s32.totalorder %s9, 0
    %p85 = por %p83, %p84
    %p86 = scmp.ne.s32.totalorder %s78, %s80
    %p87 = scmp.eq.s32.totalorder %s14, 1
    %p88 = por %p86, %p87
    %p89 = scmp.ne.s32.totalorder %s80, %s81
    %p90 = scmp.eq.s32.totalorder %s14, 0
    %p91 = por %p89, %p90
    %p92 = scmp.ne.s32.totalorder %s80, %s81
    %p93 = scmp.eq.s32.totalorder %s15, 1
    %p94 = por %p92, %p93
    %p96 = scmp.ne.s32.totalorder %s81, %s95
    %p97 = scmp.eq.s32.totalorder %s15, 0
    %p98 = por %p96, %p97
    %s99 = ssub.s32 %s16, %s28
    %s100 = ssub.s32 %s17, %s24
    %s101 = sor.u32 %s99, %s100
    %p102 = scmp.eq.s32.totalorder %s101, 0
    %s104 = sadd.s32 %s103, 1
    %s105 = scalar_select %p102, %s103, %s104
    %p108 = pneg %p102
    %p109 = scmp.eq.s32.totalorder %s9, 1
    %p110 = por %p108, %p109
    %p111 = scmp.ne.s32.totalorder %s103, %s106
    %p112 = scmp.eq.s32.totalorder %s9, 0
    %p113 = por %p111, %p112
    %p114 = scmp.ne.s32.totalorder %s103, %s106
    %p115 = scmp.eq.s32.totalorder %s14, 1
    %p116 = por %p114, %p115
    %p117 = scmp.ne.s32.totalorder %s106, %s107
    %p118 = scmp.eq.s32.totalorder %s14, 0
    %p119 = por %p117, %p118
    %p120 = scmp.ne.s32.totalorder %s106, %s107
    %p121 = scmp.eq.s32.totalorder %s15, 1
    %p122 = por %p120, %p121
    %p124 = scmp.ne.s32.totalorder %s107, %s123
    %p125 = scmp.eq.s32.totalorder %s15, 0
    %p126 = por %p124, %p125
    %p127 = scmp.le.s32.totalorder 1, %s9
    %p128 = scmp.lt.s32.totalorder %s9, 3
    %p129 = pnand %p127, %p128
    %p130 = pneg %p129
    // Predicated region
    $region9: #{conv_bn_relu.3} parent=5 // pred_check
      _
    $region10: #{conv_bn_relu.3} parent=5 // pred_check_branch
      %132 = sbr.rel (%p129) target = $region12
    $region11: #{conv_bn_relu.3} parent=5 // pred_region
      %s133 = ssub.s32 %s9, 1
      // Predicated region
      $region13: #{conv_bn_relu.3} parent=11 // pred_check
        %p134 = pneg %p70
      $region14: #{conv_bn_relu.3} parent=11 // pred_check_branch
        %136 = sbr.rel (%p134) target = $region16
      $region15: #{conv_bn_relu.3} parent=11 // pred_region
        _
      $region16: #{conv_bn_relu.3} parent=11 // pred_fallthru
        _
      // Predicated region
      $region17: #{conv_bn_relu.3} parent=11 // pred_check
        %p137 = pneg %p91
      $region18: #{conv_bn_relu.3} parent=11 // pred_check_branch
        %139 = sbr.rel (%p137) target = $region20
      $region19: #{conv_bn_relu.3} parent=11 // pred_region
        _
      $region20: #{conv_bn_relu.3} parent=11 // pred_fallthru
        _
    $region12: #{conv_bn_relu.3} parent=5 // pred_fallthru
      _
    %p140 = scmp.lt.s32.totalorder %s9, 2
    // Predicated region
    $region21: #{conv_bn_relu.3} parent=5 // pred_check
      %p141 = pneg %p140
    $region22: #{conv_bn_relu.3} parent=5 // pred_check_branch
      %143 = sbr.rel (%p141) target = $region24
    $region23: #{conv_bn_relu.3} parent=5 // pred_region
      // Predicated region
      $region25: #{conv_bn_relu.3} parent=23 // pred_check
        %p144 = pneg %p43
      $region26: #{conv_bn_relu.3} parent=23 // pred_check_branch
        %146 = sbr.rel (%p144) target = $region28
      $region27: #{conv_bn_relu.3} parent=23 // pred_region
        %s147 = smul.u32 32, %s17
        %p148 = scmp.lt.s32.totalorder %s16, 1
        %s149 = scalar_select %p148, %s16, 1
        %p150 = scmp.lt.s32.totalorder %s147, 31
        %s151 = scalar_select %p150, %s147, 31
        %s152 = smul.addr %s149, 32
        %s153 = sadd.s32 %s151, %s152
        %s154 = smul.addr %s153, 8
        %s155 = scalar_lea.vmem %s0, %s154
        %s156 = smul.u32 32, %s17
      $region28: #{conv_bn_relu.3} parent=23 // pred_fallthru
        _
    $region24: #{conv_bn_relu.3} parent=5 // pred_fallthru
      _
    %p157 = scmp.le.s32.totalorder 1, %s9
    %p158 = scmp.lt.s32.totalorder %s9, 3
    %p159 = pnand %p157, %p158
    %p160 = pneg %p159
    // Predicated region
    $region29: #{conv_bn_relu.3} parent=5 // pred_check
      _
    $region30: #{conv_bn_relu.3} parent=5 // pred_check_branch
      %162 = sbr.rel (%p159) target = $region32
    $region31: #{conv_bn_relu.3} parent=5 // pred_region
      %s163 = ssub.s32 %s9, 1
      %s164 = smul.u32 32, %s19
      %p165 = scmp.lt.s32.totalorder %s18, 1
      %s166 = scalar_select %p165, %s18, 1
      %p167 = scmp.lt.s32.totalorder %s164, 31
      %s168 = scalar_select %p167, %s164, 31
      %s169 = smul.addr %s166, 32
      %s170 = sadd.s32 %s168, %s169
      %s171 = smul.addr %s170, 8
      %s172 = scalar_lea.vmem %s0, %s171
      %p173 = pneg %p49
      %p174 = pneg %p46
      %p175 = pneg %p70
      %p176 = pneg %p67
      %p177 = pneg %p91
      %p178 = pneg %p88
      %p179 = pneg %p119
      %p180 = pneg %p116
      %s181 = smul.u32 2, %s19
      %p182 = scmp.lt.s32.totalorder %s18, 1
      %s183 = scalar_select %p182, %s18, 1
      %p184 = scmp.lt.s32.totalorder %s181, 1
      %s185 = scalar_select %p184, %s181, 1
      %s186 = smul.addr %s183, 2
      %s187 = sadd.s32 %s185, %s186
      %s188 = smul.addr %s187, 8
      %s189 = scalar_lea.vmem %s3, %s188
      %s190 = smul.u32 32, %s19
      %p191 = scmp.lt.s32.totalorder %s18, 1
      %s192 = scalar_select %p191, %s18, 1
      %p193 = scmp.lt.s32.totalorder %s190, 31
      %s194 = scalar_select %p193, %s190, 31
      %s195 = smul.addr %s192, 32
      %s196 = sadd.s32 %s194, %s195
      %s197 = smul.addr %s196, 8
      %s198 = scalar_lea.vmem %s0, %s197
      %s199 = smul.u32 32, %s19
      %s200 = smul.u32 2, %s19
      %p201 = scmp.lt.s32.totalorder %s18, 1
      %s202 = scalar_select %p201, %s18, 1
      %p203 = scmp.lt.s32.totalorder %s200, 1
      %s204 = scalar_select %p203, %s200, 1
      %s205 = smul.addr %s202, 2
      %s206 = sadd.s32 %s204, %s205
      %s207 = smul.addr %s206, 8
      %s208 = scalar_lea.vmem %s3, %s207
      %s209 = smul.u32 2, %s19
      %v210 = vld [vmem:[%s198] sm:$0xff]
      %v211 = vld [vmem:[%s198 + $0x8] sm:$0xff]
      %v212 = vld [vmem:[%s198 + $0x10] sm:$0xff]
      %v213 = vld [vmem:[%s198 + $0x18] sm:$0xff]
      %v214 = vld [vmem:[%s198 + $0x20] sm:$0xff]
      %v215 = vld [vmem:[%s198 + $0x28] sm:$0xff]
      %v216 = vld [vmem:[%s198 + $0x30] sm:$0xff]
      %v217 = vld [vmem:[%s198 + $0x38] sm:$0xff]
      %v218 = vld [vmem:[%s198 + $0x40] sm:$0xff]
      %v219 = vld [vmem:[%s198 + $0x48] sm:$0xff]
      %v220 = vld [vmem:[%s198 + $0x50] sm:$0xff]
      %v221 = vld [vmem:[%s198 + $0x58] sm:$0xff]
      %v222 = vld [vmem:[%s198 + $0x60] sm:$0xff]
      %v223 = vld [vmem:[%s198 + $0x68] sm:$0xff]
      %v224 = vld [vmem:[%s198 + $0x70] sm:$0xff]
      %v225 = vld [vmem:[%s198 + $0x78] sm:$0xff]
      %v226 = vld [vmem:[%s198 + $0x80] sm:$0xff]
      %v227 = vld [vmem:[%s198 + $0x88] sm:$0xff]
      %v228 = vld [vmem:[%s198 + $0x90] sm:$0xff]
      %v229 = vld [vmem:[%s198 + $0x98] sm:$0xff]
      %v230 = vld [vmem:[%s198 + $0xa0] sm:$0xff]
      %v231 = vld [vmem:[%s198 + $0xa8] sm:$0xff]
      %v232 = vld [vmem:[%s198 + $0xb0] sm:$0xff]
      %v233 = vld [vmem:[%s198 + $0xb8] sm:$0xff]
      %v234 = vld [vmem:[%s198 + $0xc0] sm:$0xff]
      %v235 = vld [vmem:[%s198 + $0xc8] sm:$0xff]
      %v236 = vld [vmem:[%s198 + $0xd0] sm:$0xff]
      %v237 = vld [vmem:[%s198 + $0xd8] sm:$0xff]
      %v238 = vld [vmem:[%s198 + $0xe0] sm:$0xff]
      %v239 = vld [vmem:[%s198 + $0xe8] sm:$0xff]
      %v240 = vld [vmem:[%s198 + $0xf0] sm:$0xff]
      %v241 = vld [vmem:[%s198 + $0xf8] sm:$0xff]
      %v242 = vld [vmem:[%s1] sm:$0x1]
      %v244 = vperm.slane %v242, 0
      %v246 = vmul.f32 %v210, %v244
      %v247 = vmul.f32 %v211, %v244
      %v248 = vmul.f32 %v212, %v244
      %v249 = vmul.f32 %v213, %v244
      %v250 = vmul.f32 %v214, %v244
      %v251 = vmul.f32 %v215, %v244
      %v252 = vmul.f32 %v216, %v244
      %v253 = vmul.f32 %v217, %v244
      %v254 = vmul.f32 %v218, %v244
      %v255 = vmul.f32 %v219, %v244
      %v256 = vmul.f32 %v220, %v244
      %v257 = vmul.f32 %v221, %v244
      %v258 = vmul.f32 %v222, %v244
      %v259 = vmul.f32 %v223, %v244
      %v260 = vmul.f32 %v224, %v244
      %v261 = vmul.f32 %v225, %v244
      %v262 = vmul.f32 %v226, %v244
      %v263 = vmul.f32 %v227, %v244
      %v264 = vmul.f32 %v228, %v244
      %v265 = vmul.f32 %v229, %v244
      %v266 = vmul.f32 %v230, %v244
      %v267 = vmul.f32 %v231, %v244
      %v268 = vmul.f32 %v232, %v244
      %v269 = vmul.f32 %v233, %v244
      %v270 = vmul.f32 %v234, %v244
      %v271 = vmul.f32 %v235, %v244
      %v272 = vmul.f32 %v236, %v244
      %v273 = vmul.f32 %v237, %v244
      %v274 = vmul.f32 %v238, %v244
      %v275 = vmul.f32 %v239, %v244
      %v276 = vmul.f32 %v240, %v244
      %v277 = vmul.f32 %v241, %v244
      %v278 = vld [vmem:[%s2] sm:$0x1]
      %v280 = vperm.slane %v278, 0
      %v282 = vadd.f32 %v246, %v280
      %v283 = vadd.f32 %v247, %v280
      %v284 = vadd.f32 %v248, %v280
      %v285 = vadd.f32 %v249, %v280
      %v286 = vadd.f32 %v250, %v280
      %v287 = vadd.f32 %v251, %v280
      %v288 = vadd.f32 %v252, %v280
      %v289 = vadd.f32 %v253, %v280
      %v290 = vadd.f32 %v254, %v280
      %v291 = vadd.f32 %v255, %v280
      %v292 = vadd.f32 %v256, %v280
      %v293 = vadd.f32 %v257, %v280
      %v294 = vadd.f32 %v258, %v280
      %v295 = vadd.f32 %v259, %v280
      %v296 = vadd.f32 %v260, %v280
      %v297 = vadd.f32 %v261, %v280
      %v298 = vadd.f32 %v262, %v280
      %v299 = vadd.f32 %v263, %v280
      %v300 = vadd.f32 %v264, %v280
      %v301 = vadd.f32 %v265, %v280
      %v302 = vadd.f32 %v266, %v280
      %v303 = vadd.f32 %v267, %v280
      %v304 = vadd.f32 %v268, %v280
      %v305 = vadd.f32 %v269, %v280
      %v306 = vadd.f32 %v270, %v280
      %v307 = vadd.f32 %v271, %v280
      %v308 = vadd.f32 %v272, %v280
      %v309 = vadd.f32 %v273, %v280
      %v310 = vadd.f32 %v274, %v280
      %v311 = vadd.f32 %v275, %v280
      %v312 = vadd.f32 %v276, %v280
      %v313 = vadd.f32 %v277, %v280
      %v314 = vmax.f32 %v282, 0.0
      %v315 = vmax.f32 %v283, 0.0
      %v316 = vmax.f32 %v284, 0.0
      %v317 = vmax.f32 %v285, 0.0
      %v318 = vmax.f32 %v286, 0.0
      %v319 = vmax.f32 %v287, 0.0
      %v320 = vmax.f32 %v288, 0.0
      %v321 = vmax.f32 %v289, 0.0
      %v322 = vmax.f32 %v290, 0.0
      %v323 = vmax.f32 %v291, 0.0
      %v324 = vmax.f32 %v292, 0.0
      %v325 = vmax.f32 %v293, 0.0
      %v326 = vmax.f32 %v294, 0.0
      %v327 = vmax.f32 %v295, 0.0
      %v328 = vmax.f32 %v296, 0.0
      %v329 = vmax.f32 %v297, 0.0
      %v330 = vmax.f32 %v298, 0.0
      %v331 = vmax.f32 %v299, 0.0
      %v332 = vmax.f32 %v300, 0.0
      %v333 = vmax.f32 %v301, 0.0
      %v334 = vmax.f32 %v302, 0.0
      %v335 = vmax.f32 %v303, 0.0
      %v336 = vmax.f32 %v304, 0.0
      %v337 = vmax.f32 %v305, 0.0
      %v338 = vmax.f32 %v306, 0.0
      %v339 = vmax.f32 %v307, 0.0
      %v340 = vmax.f32 %v308, 0.0
      %v341 = vmax.f32 %v309, 0.0
      %v342 = vmax.f32 %v310, 0.0
      %v343 = vmax.f32 %v311, 0.0
      %v344 = vmax.f32 %v312, 0.0
      %v345 = vmax.f32 %v313, 0.0
      %346 = vxpose.xlu0.b32.start [1/16] %v314, 128
      %347 = vxpose.xlu0.b32.cont [2/16] %v315, 128
      %348 = vxpose.xlu0.b32.cont [3/16] %v316, 128
      %349 = vxpose.xlu0.b32.cont [4/16] %v317, 128
      %350 = vxpose.xlu0.b32.cont [5/16] %v318, 128
      %351 = vxpose.xlu0.b32.cont [6/16] %v319, 128
      %352 = vxpose.xlu0.b32.cont [7/16] %v320, 128
      %353 = vxpose.xlu0.b32.cont [8/16] %v321, 128
      %354 = vxpose.xlu0.b32.cont [9/16] %v322, 128
      %355 = vxpose.xlu0.b32.cont [10/16] %v323, 128
      %356 = vxpose.xlu0.b32.cont [11/16] %v324, 128
      %357 = vxpose.xlu0.b32.cont [12/16] %v325, 128
      %358 = vxpose.xlu0.b32.cont [13/16] %v326, 128
      %359 = vxpose.xlu0.b32.cont [14/16] %v327, 128
      %360 = vxpose.xlu0.b32.cont [15/16] %v328, 128
      %361 = vxpose.xlu0.b32.end [16/16] %v329, 128
      %v362 = vpop.trf.xlu0
      %v363 = vpop.trf.xlu0
      %v364 = vpop.trf.xlu0
      %v365 = vpop.trf.xlu0
      %v366 = vpop.trf.xlu0
      %v367 = vpop.trf.xlu0
      %v368 = vpop.trf.xlu0
      %v369 = vpop.trf.xlu0
      %v370 = vpop.trf.xlu0
      %v371 = vpop.trf.xlu0
      %v372 = vpop.trf.xlu0
      %v373 = vpop.trf.xlu0
      %v374 = vpop.trf.xlu0
      %v375 = vpop.trf.xlu0
      %v376 = vpop.trf.xlu0
      %v377 = vpop.trf.xlu0
      %378 = vxpose.xlu0.b32.start [1/16] %v330, 128
      %379 = vxpose.xlu0.b32.cont [2/16] %v331, 128
      %380 = vxpose.xlu0.b32.cont [3/16] %v332, 128
      %381 = vxpose.xlu0.b32.cont [4/16] %v333, 128
      %382 = vxpose.xlu0.b32.cont [5/16] %v334, 128
      %383 = vxpose.xlu0.b32.cont [6/16] %v335, 128
      %384 = vxpose.xlu0.b32.cont [7/16] %v336, 128
      %385 = vxpose.xlu0.b32.cont [8/16] %v337, 128
      %386 = vxpose.xlu0.b32.cont [9/16] %v338, 128
      %387 = vxpose.xlu0.b32.cont [10/16] %v339, 128
      %388 = vxpose.xlu0.b32.cont [11/16] %v340, 128
      %389 = vxpose.xlu0.b32.cont [12/16] %v341, 128
      %390 = vxpose.xlu0.b32.cont [13/16] %v342, 128
      %391 = vxpose.xlu0.b32.cont [14/16] %v343, 128
      %392 = vxpose.xlu0.b32.cont [15/16] %v344, 128
      %393 = vxpose.xlu0.b32.end [16/16] %v345, 128
      %v394 = vpop.trf.xlu0
      %v395 = vpop.trf.xlu0
      %v396 = vpop.trf.xlu0
      %v397 = vpop.trf.xlu0
      %v398 = vpop.trf.xlu0
      %v399 = vpop.trf.xlu0
      %v400 = vpop.trf.xlu0
      %v401 = vpop.trf.xlu0
      %v402 = vpop.trf.xlu0
      %v403 = vpop.trf.xlu0
      %v404 = vpop.trf.xlu0
      %v405 = vpop.trf.xlu0
      %v406 = vpop.trf.xlu0
      %v407 = vpop.trf.xlu0
      %v408 = vpop.trf.xlu0
      %v409 = vpop.trf.xlu0
      %410 = vst [vmem:[%s208] sm:$0xff] %v362
      %411 = vst [vmem:[%s208 + $0x8] sm:$0xff] %v394
      %s412 = smul.u32 2, %s19
      %p413 = scmp.lt.s32.totalorder %s18, 1
      %s414 = scalar_select %p413, %s18, 1
      %p415 = scmp.lt.s32.totalorder %s412, 1
      %s416 = scalar_select %p415, %s412, 1
      %s417 = smul.addr %s414, 2
      %s418 = sadd.s32 %s416, %s417
      %s419 = smul.addr %s418, 8
      %s420 = scalar_lea.vmem %s3, %s419
      // Predicated region
      $region33: #{conv_bn_relu.3} parent=31 // pred_check
        %p421 = pneg %p116
      $region34: #{conv_bn_relu.3} parent=31 // pred_check_branch
        %423 = sbr.rel (%p421) target = $region36
      $region35: #{conv_bn_relu.3} parent=31 // pred_region
        %s424 = smul.u32 2, %s19
      $region36: #{conv_bn_relu.3} parent=31 // pred_fallthru
        _
    $region32: #{conv_bn_relu.3} parent=5 // pred_fallthru
      _
    %p425 = scmp.le.s32.totalorder 2, %s9
    // Predicated region
    $region37: #{conv_bn_relu.3} parent=5 // pred_check
      %p426 = pneg %p425
    $region38: #{conv_bn_relu.3} parent=5 // pred_check_branch
      %428 = sbr.rel (%p426) target = $region40
    $region39: #{conv_bn_relu.3} parent=5 // pred_region
      %s429 = ssub.s32 %s9, 2
      // Predicated region
      $region41: #{conv_bn_relu.3} parent=39 // pred_check
        %p430 = pneg %p122
      $region42: #{conv_bn_relu.3} parent=39 // pred_check_branch
        %432 = sbr.rel (%p430) target = $region44
      $region43: #{conv_bn_relu.3} parent=39 // pred_region
        %s433 = smul.u32 2, %s21
        %p434 = scmp.lt.s32.totalorder %s20, 1
        %s435 = scalar_select %p434, %s20, 1
        %p436 = scmp.lt.s32.totalorder %s433, 1
        %s437 = scalar_select %p436, %s433, 1
        %s438 = smul.addr %s435, 2
        %s439 = sadd.s32 %s437, %s438
        %s440 = smul.addr %s439, 8
        %s441 = scalar_lea.vmem %s3, %s440
      $region44: #{conv_bn_relu.3} parent=39 // pred_fallthru
        _
    $region40: #{conv_bn_relu.3} parent=5 // pred_fallthru
      _
  $region6: #{conv_bn_relu.3} parent=0 // loop_footer
    %s13 = sadd.s32 1, %s9
  $region7: #{conv_bn_relu.3} parent=0 // loop_footer_branch
    %8 = sbr.rel target = $region3
  $region8: #{conv_bn_relu.3} parent=0 // loop_exit
    _

// kernel: conv_bn_relu.2
$region0: #{conv_bn_relu.2}
  #allocation0 [shape = 'u32[]', space=smem, size = 0x4, offset = 0x4, fixed_abs, tag = 'smem constant byte address 0x4 - core index']
  #allocation1 [shape = 'u32[72,128]{1,0:T(1,128)}', space=vmem, size = 0x9000, scoped, tag = 'internal scratch']
  %s0 = inlined_call_operand.vmem [shape: f32[2,1,18,18,8], index: 0, kind: input, shape index: {}]
  %s1 = inlined_call_operand.vmem [shape: f32[72,128], index: 1, kind: input, shape index: {}]
  %s2 = inlined_call_operand.vmem [shape: f32[2,16,16,128], index: 2, kind: output, shape index: {0}]
  %s3 = inlined_call_operand.vmem [shape: f32[2,1,2,128], index: 3, kind: output, shape index: {1}]
  %4 = xla_tuple %s2, %s3
  %s5 = sld [smem:[#allocation0]]
  $region49: #{conv_bn_relu.2} parent=0
    _
  %s7 = ssub.s32 1, %s5
  %s8 = scalar_select 0, %s7, %s5
  loop: start=0, step=1, limit=4
  $region2: #{conv_bn_relu.2} parent=0 // loop_pre_header
    _
  $region3: #{conv_bn_relu.2} parent=0 // loop_header
    %s10 = sphi 0, %s14
    %p11 = scmp.ge.s32.totalorder %s10, 4
    %s17 = sphi 0, %s36
    %s18 = sphi 0, %s32
    %s19 = sphi 0, %s28
    %s20 = sphi 0, %s17
    %s21 = sphi 0, %s18
    %s22 = sphi 0, %s19
    %s23 = sphi 0, %s20
    %s24 = sphi 0, %s21
    %s25 = sphi 0, %s22
    %s41 = sphi 0, %s43
    %s44 = sphi 0, %s41
    %s45 = sphi 0, %s44
    %s61 = sphi 0, %s45
    %s67 = sphi 0, %s69
    %s70 = sphi 0, %s67
    %s71 = sphi 0, %s70
    %s87 = sphi 0, %s71
    %s97 = sphi 0, %s99
    %s100 = sphi 0, %s97
    %s101 = sphi 0, %s100
    %s117 = sphi 0, %s101
    %s127 = sphi 0, %s129
    %s130 = sphi 0, %s127
    %s131 = sphi 0, %s130
    %s147 = sphi 0, %s131
  $region4: #{conv_bn_relu.2} parent=0 // loop_header_branch
    %13 = sbr.rel (%p11) target = $region8
  $region5: #{conv_bn_relu.2} parent=0 // loop_body
    %s15 = ssub.s32 %s10, 1
    %s16 = ssub.s32 %s10, 2
    %s26 = sadd.s32 1, %s19
    %p27 = scmp.ge.s32.totalorder %s26, 1
    %s28 = scalar_select %p27, 0, %s26
    %s29 = sadd.s32 1, %s18
    %s30 = scalar_select %p27, %s29, %s18
    %p31 = scmp.ge.s32.totalorder %s30, 1
    %s32 = scalar_select %p31, 0, %s30
    %s33 = sadd.s32 1, %s17
    %s34 = scalar_select %p31, %s33, %s17
    %p35 = scmp.ge.s32.totalorder %s34, 2
    %s36 = scalar_select %p35, 0, %s34
    %s37 = ssub.s32 %s17, %s36
    %s38 = ssub.s32 %s18, %s32
    %s39 = sor.u32 %s37, %s38
    %p40 = scmp.eq.s32.totalorder %s39, 0
    %s42 = sadd.s32 %s41, 1
    %s43 = scalar_select %p40, %s41, %s42
    %p46 = pneg %p40
    %p47 = scmp.eq.s32.totalorder %s10, 1
    %p48 = por %p46, %p47
    %p49 = scmp.ne.s32.totalorder %s41, %s44
    %p50 = scmp.eq.s32.totalorder %s10, 0
    %p51 = por %p49, %p50
    %p52 = scmp.ne.s32.totalorder %s41, %s44
    %p53 = scmp.eq.s32.totalorder %s15, 1
    %p54 = por %p52, %p53
    %p55 = scmp.ne.s32.totalorder %s44, %s45
    %p56 = scmp.eq.s32.totalorder %s15, 0
    %p57 = por %p55, %p56
    %p58 = scmp.ne.s32.totalorder %s44, %s45
    %p59 = scmp.eq.s32.totalorder %s16, 1
    %p60 = por %p58, %p59
    %p62 = scmp.ne.s32.totalorder %s45, %s61
    %p63 = scmp.eq.s32.totalorder %s16, 0
    %p64 = por %p62, %p63
    %s65 = ssub.s32 %s19, %s28
    %p66 = scmp.eq.s32.totalorder %s65, 0
    %s68 = sadd.s32 %s67, 1
    %s69 = scalar_select %p66, %s67, %s68
    %p72 = pneg %p66
    %p73 = scmp.eq.s32.totalorder %s10, 1
    %p74 = por %p72, %p73
    %p75 = scmp.ne.s32.totalorder %s67, %s70
    %p76 = scmp.eq.s32.totalorder %s10, 0
    %p77 = por %p75, %p76
    %p78 = scmp.ne.s32.totalorder %s67, %s70
    %p79 = scmp.eq.s32.totalorder %s15, 1
    %p80 = por %p78, %p79
    %p81 = scmp.ne.s32.totalorder %s70, %s71
    %p82 = scmp.eq.s32.totalorder %s15, 0
    %p83 = por %p81, %p82
    %p84 = scmp.ne.s32.totalorder %s70, %s71
    %p85 = scmp.eq.s32.totalorder %s16, 1
    %p86 = por %p84, %p85
    %p88 = scmp.ne.s32.totalorder %s71, %s87
    %p89 = scmp.eq.s32.totalorder %s16, 0
    %p90 = por %p88, %p89
    %s91 = ssub.s32 %s17, %s36
    %s92 = ssub.s32 %s18, %s32
    %s93 = sor.u32 %s91, %s92
    %s94 = ssub.s32 %s19, %s28
    %s95 = sor.u32 %s93, %s94
    %p96 = scmp.eq.s32.totalorder %s95, 0
    %s98 = sadd.s32 %s97, 1
    %s99 = scalar_select %p96, %s97, %s98
    %p102 = pneg %p96
    %p103 = scmp.eq.s32.totalorder %s10, 1
    %p104 = por %p102, %p103
    %p105 = scmp.ne.s32.totalorder %s97, %s100
    %p106 = scmp.eq.s32.totalorder %s10, 0
    %p107 = por %p105, %p106
    %p108 = scmp.ne.s32.totalorder %s97, %s100
    %p109 = scmp.eq.s32.totalorder %s15, 1
    %p110 = por %p108, %p109
    %p111 = scmp.ne.s32.totalorder %s100, %s101
    %p112 = scmp.eq.s32.totalorder %s15, 0
    %p113 = por %p111, %p112
    %p114 = scmp.ne.s32.totalorder %s100, %s101
    %p115 = scmp.eq.s32.totalorder %s16, 1
    %p116 = por %p114, %p115
    %p118 = scmp.ne.s32.totalorder %s101, %s117
    %p119 = scmp.eq.s32.totalorder %s16, 0
    %p120 = por %p118, %p119
    %s121 = ssub.s32 %s17, %s36
    %s122 = ssub.s32 %s18, %s32
    %s123 = sor.u32 %s121, %s122
    %s124 = ssub.s32 %s19, %s28
    %s125 = sor.u32 %s123, %s124
    %p126 = scmp.eq.s32.totalorder %s125, 0
    %s128 = sadd.s32 %s127, 1
    %s129 = scalar_select %p126, %s127, %s128
    %p132 = pneg %p126
    %p133 = scmp.eq.s32.totalorder %s10, 1
    %p134 = por %p132, %p133
    %p135 = scmp.ne.s32.totalorder %s127, %s130
    %p136 = scmp.eq.s32.totalorder %s10, 0
    %p137 = por %p135, %p136
    %p138 = scmp.ne.s32.totalorder %s127, %s130
    %p139 = scmp.eq.s32.totalorder %s15, 1
    %p140 = por %p138, %p139
    %p141 = scmp.ne.s32.totalorder %s130, %s131
    %p142 = scmp.eq.s32.totalorder %s15, 0
    %p143 = por %p141, %p142
    %p144 = scmp.ne.s32.totalorder %s130, %s131
    %p145 = scmp.eq.s32.totalorder %s16, 1
    %p146 = por %p144, %p145
    %p148 = scmp.ne.s32.totalorder %s131, %s147
    %p149 = scmp.eq.s32.totalorder %s16, 0
    %p150 = por %p148, %p149
    %p151 = scmp.le.s32.totalorder 1, %s10
    %p152 = scmp.lt.s32.totalorder %s10, 3
    %p153 = pnand %p151, %p152
    %p154 = pneg %p153
    // Predicated region
    $region9: #{conv_bn_relu.2} parent=5 // pred_check
      _
    $region10: #{conv_bn_relu.2} parent=5 // pred_check_branch
      %156 = sbr.rel (%p153) target = $region12
    $region11: #{conv_bn_relu.2} parent=5 // pred_region
      %s157 = ssub.s32 %s10, 1
      // Predicated region
      $region13: #{conv_bn_relu.2} parent=11 // pred_check
        %p158 = pneg %p83
      $region14: #{conv_bn_relu.2} parent=11 // pred_check_branch
        %160 = sbr.rel (%p158) target = $region16
      $region15: #{conv_bn_relu.2} parent=11 // pred_region
        %p161 = scmp.lt.s32.totalorder %s22, 0
        %s162 = scalar_select %p161, %s22, 0
        %s163 = smul.addr %s162, 8
        %s164 = scalar_lea.vmem %s1, %s163
      $region16: #{conv_bn_relu.2} parent=11 // pred_fallthru
        _
    $region12: #{conv_bn_relu.2} parent=5 // pred_fallthru
      _
    %p165 = scmp.lt.s32.totalorder %s10, 2
    // Predicated region
    $region17: #{conv_bn_relu.2} parent=5 // pred_check
      %p166 = pneg %p165
    $region18: #{conv_bn_relu.2} parent=5 // pred_check_branch
      %168 = sbr.rel (%p166) target = $region20
    $region19: #{conv_bn_relu.2} parent=5 // pred_region
      // Predicated region
      $region21: #{conv_bn_relu.2} parent=19 // pred_check
        %p169 = pneg %p51
      $region22: #{conv_bn_relu.2} parent=19 // pred_check_branch
        %171 = sbr.rel (%p169) target = $region24
      $region23: #{conv_bn_relu.2} parent=19 // pred_region
        %p172 = scmp.lt.s32.totalorder %s17, 1
        %s173 = scalar_select %p172, %s17, 1
        %p174 = scmp.lt.s32.totalorder %s18, 0
        %s175 = scalar_select %p174, %s18, 0
        %s176 = smul.addr %s175, 54
        %s177 = smul.addr %s173, 54
        %s178 = sadd.s32 %s176, %s177
        %s179 = smul.addr %s178, 8
        %s180 = scalar_lea.vmem %s0, %s179
      $region24: #{conv_bn_relu.2} parent=19 // pred_fallthru
        _
    $region20: #{conv_bn_relu.2} parent=5 // pred_fallthru
      _
    %p181 = scmp.le.s32.totalorder 1, %s10
    %p182 = scmp.lt.s32.totalorder %s10, 3
    %p183 = pnand %p181, %p182
    %p184 = pneg %p183
    // Predicated region
    $region25: #{conv_bn_relu.2} parent=5 // pred_check
      _
    $region26: #{conv_bn_relu.2} parent=5 // pred_check_branch
      %186 = sbr.rel (%p183) target = $region28
    $region27: #{conv_bn_relu.2} parent=5 // pred_region
      %s187 = ssub.s32 %s10, 1
      %p188 = scmp.lt.s32.totalorder %s20, 1
      %s189 = scalar_select %p188, %s20, 1
      %p190 = scmp.lt.s32.totalorder %s21, 0
      %s191 = scalar_select %p190, %s21, 0
      %s192 = smul.addr %s191, 54
      %s193 = smul.addr %s189, 54
      %s194 = sadd.s32 %s192, %s193
      %s195 = smul.addr %s194, 8
      %s196 = scalar_lea.vmem %s0, %s195
      %p197 = pneg %p57
      %p198 = pneg %p54
      %p199 = scmp.lt.s32.totalorder %s22, 0
      %s200 = scalar_select %p199, %s22, 0
      %s201 = smul.addr %s200, 8
      %s202 = scalar_lea.vmem %s1, %s201
      %p203 = pneg %p83
      %p204 = pneg %p80
      %p205 = pneg %p113
      %p206 = pneg %p110
      %s207 = smul.u32 16, %s21
      %p208 = scmp.lt.s32.totalorder %s20, 1
      %s209 = scalar_select %p208, %s20, 1
      %p210 = scmp.lt.s32.totalorder %s207, 15
      %s211 = scalar_select %p210, %s207, 15
      %p212 = scmp.lt.s32.totalorder %s22, 0
      %s213 = scalar_select %p212, %s22, 0
      %s214 = smul.addr %s211, 2
      %s215 = sadd.s32 %s213, %s214
      %s216 = smul.addr %s209, 32
      %s217 = sadd.s32 %s215, %s216
      %s218 = smul.addr %s217, 8
      %s219 = scalar_lea.vmem %s2, %s218
      %p220 = pneg %p143
      %p221 = pneg %p140
      %p222 = scmp.lt.s32.totalorder %s20, 1
      %s223 = scalar_select %p222, %s20, 1
      %p224 = scmp.lt.s32.totalorder %s21, 0
      %s225 = scalar_select %p224, %s21, 0
      %p226 = scmp.lt.s32.totalorder %s22, 0
      %s227 = scalar_select %p226, %s22, 0
      %s228 = sadd.s32 %s227, %s225
      %s229 = sadd.s32 %s228, %s223
      %s230 = smul.addr %s229, 2
      %s231 = scalar_lea.vmem %s3, %s230
      %p232 = scmp.lt.s32.totalorder %s20, 1
      %s233 = scalar_select %p232, %s20, 1
      %p234 = scmp.lt.s32.totalorder %s21, 0
      %s235 = scalar_select %p234, %s21, 0
      %s236 = smul.addr %s235, 54
      %s237 = smul.addr %s233, 54
      %s238 = sadd.s32 %s236, %s237
      %s239 = smul.addr %s238, 8
      %s240 = scalar_lea.vmem %s0, %s239
      %p241 = scmp.lt.s32.totalorder %s22, 0
      %s242 = scalar_select %p241, %s22, 0
      %s243 = smul.addr %s242, 8
      %s244 = scalar_lea.vmem %s1, %s243
      %s245 = smul.u32 16, %s21
      %p246 = scmp.lt.s32.totalorder %s20, 1
      %s247 = scalar_select %p246, %s20, 1
      %p248 = scmp.lt.s32.totalorder %s245, 15
      %s249 = scalar_select %p248, %s245, 15
      %p250 = scmp.lt.s32.totalorder %s22, 0
      %s251 = scalar_select %p250, %s22, 0
      %s252 = smul.addr %s249, 2
      %s253 = sadd.s32 %s251, %s252
      %s254 = smul.addr %s247, 32
      %s255 = sadd.s32 %s253, %s254
      %s256 = smul.addr %s255, 8
      %s257 = scalar_lea.vmem %s2, %s256
      %s258 = smul.u32 16, %s21
      %p259 = scmp.lt.s32.totalorder %s20, 1
      %s260 = scalar_select %p259, %s20, 1
      %p261 = scmp.lt.s32.totalorder %s21, 0
      %s262 = scalar_select %p261, %s21, 0
      %p263 = scmp.lt.s32.totalorder %s22, 0
      %s264 = scalar_select %p263, %s22, 0
      %s265 = sadd.s32 %s264, %s262
      %s266 = sadd.s32 %s265, %s260
      %s267 = smul.addr %s266, 2
      %s268 = scalar_lea.vmem %s3, %s267
      %v269 = vld [vmem:[%s240] sm:$0xff]
      %v270 = vld [vmem:[%s240 + $0x8] sm:$0xff]
      %v271 = vld [vmem:[%s240 + $0x18] sm:$0xff]
      %v272 = vld [vmem:[%s240 + $0x20] sm:$0xff]
      %v273 = vld [vmem:[%s240 + $0x30] sm:$0xff]
      %v274 = vld [vmem:[%s240 + $0x38] sm:$0xff]
      %v275 = vld [vmem:[%s240 + $0x48] sm:$0xff]
      %v276 = vld [vmem:[%s240 + $0x50] sm:$0xff]
      %v277 = vld [vmem:[%s240 + $0x60] sm:$0xff]
      %v278 = vld [vmem:[%s240 + $0x68] sm:$0xff]
      %v279 = vld [vmem:[%s240 + $0x78] sm:$0xff]
      %v280 = vld [vmem:[%s240 + $0x80] sm:$0xff]
      %v281 = vld [vmem:[%s240 + $0x90] sm:$0xff]
      %v282 = vld [vmem:[%s240 + $0x98] sm:$0xff]
      %v283 = vld [vmem:[%s240 + $0xa8] sm:$0xff]
      %v284 = vld [vmem:[%s240 + $0xb0] sm:$0xff]
      %v285 = vld [vmem:[%s240 + $0xc0] sm:$0xff]
      %v286 = vld [vmem:[%s240 + $0xc8] sm:$0xff]
      %v287 = vld [vmem:[%s240 + $0xd8] sm:$0xff]
      %v288 = vld [vmem:[%s240 + $0xe0] sm:$0xff]
      %v289 = vld [vmem:[%s240 + $0xf0] sm:$0xff]
      %v290 = vld [vmem:[%s240 + $0xf8] sm:$0xff]
      %v291 = vld [vmem:[%s240 + $0x108] sm:$0xff]
      %v292 = vld [vmem:[%s240 + $0x110] sm:$0xff]
      %v293 = vld [vmem:[%s240 + $0x120] sm:$0xff]
      %v294 = vld [vmem:[%s240 + $0x128] sm:$0xff]
      %v295 = vld [vmem:[%s240 + $0x138] sm:$0xff]
      %v296 = vld [vmem:[%s240 + $0x140] sm:$0xff]
      %v297 = vld [vmem:[%s240 + $0x150] sm:$0xff]
      %v298 = vld [vmem:[%s240 + $0x158] sm:$0xff]
      %v299 = vld [vmem:[%s240 + $0x168] sm:$0xff]
      %v300 = vld [vmem:[%s240 + $0x170] sm:$0xff]
      %v301 = vld [vmem:[%s240 + $0x1] sm:$0xff]
      %v302 = vld [vmem:[%s240 + $0x9] sm:$0xff]
      %v303 = vld [vmem:[%s240 + $0x19] sm:$0xff]
      %v304 = vld [vmem:[%s240 + $0x21] sm:$0xff]
      %v305 = vld [vmem:[%s240 + $0x31] sm:$0xff]
      %v306 = vld [vmem:[%s240 + $0x39] sm:$0xff]
      %v307 = vld [vmem:[%s240 + $0x49] sm:$0xff]
      %v308 = vld [vmem:[%s240 + $0x51] sm:$0xff]
      %v309 = vld [vmem:[%s240 + $0x61] sm:$0xff]
      %v310 = vld [vmem:[%s240 + $0x69] sm:$0xff]
      %v311 = vld [vmem:[%s240 + $0x79] sm:$0xff]
      %v312 = vld [vmem:[%s240 + $0x81] sm:$0xff]
      %v313 = vld [vmem:[%s240 + $0x91] sm:$0xff]
      %v314 = vld [vmem:[%s240 + $0x99] sm:$0xff]
      %v315 = vld [vmem:[%s240 + $0xa9] sm:$0xff]
      %v316 = vld [vmem:[%s240 + $0xb1] sm:$0xff]
      %v317 = vld [vmem:[%s240 + $0xc1] sm:$0xff]
      %v318 = vld [vmem:[%s240 + $0xc9] sm:$0xff]
      %v319 = vld [vmem:[%s240 + $0xd9] sm:$0xff]
      %v320 = vld [vmem:[%s240 + $0xe1] sm:$0xff]
      %v321 = vld [vmem:[%s240 + $0xf1] sm:$0xff]
      %v322 = vld [vmem:[%s240 + $0xf9] sm:$0xff]
      %v323 = vld [vmem:[%s240 + $0x109] sm:$0xff]
      %v324 = vld [vmem:[%s240 + $0x111] sm:$0xff]
      %v325 = vld [vmem:[%s240 + $0x121] sm:$0xff]
      %v326 = vld [vmem:[%s240 + $0x129] sm:$0xff]
      %v327 = vld [vmem:[%s240 + $0x139] sm:$0xff]
      %v328 = vld [vmem:[%s240 + $0x141] sm:$0xff]
      %v329 = vld [vmem:[%s240 + $0x151] sm:$0xff]
      %v330 = vld [vmem:[%s240 + $0x159] sm:$0xff]
      %v331 = vld [vmem:[%s240 + $0x169] sm:$0xff]
      %v332 = vld [vmem:[%s240 + $0x171] sm:$0xff]
      %v333 = vld [vmem:[%s240 + $0x2] sm:$0xff]
      %v334 = vld [vmem:[%s240 + $0xa] sm:$0xff]
      %v335 = vld [vmem:[%s240 + $0x1a] sm:$0xff]
      %v336 = vld [vmem:[%s240 + $0x22] sm:$0xff]
      %v337 = vld [vmem:[%s240 + $0x32] sm:$0xff]
      %v338 = vld [vmem:[%s240 + $0x3a] sm:$0xff]
      %v339 = vld [vmem:[%s240 + $0x4a] sm:$0xff]
      %v340 = vld [vmem:[%s240 + $0x52] sm:$0xff]
      %v341 = vld [vmem:[%s240 + $0x62] sm:$0xff]
      %v342 = vld [vmem:[%s240 + $0x6a] sm:$0xff]
      %v343 = vld [vmem:[%s240 + $0x7a] sm:$0xff]
      %v344 = vld [vmem:[%s240 + $0x82] sm:$0xff]
      %v345 = vld [vmem:[%s240 + $0x92] sm:$0xff]
      %v346 = vld [vmem:[%s240 + $0x9a] sm:$0xff]
      %v347 = vld [vmem:[%s240 + $0xaa] sm:$0xff]
      %v348 = vld [vmem:[%s240 + $0xb2] sm:$0xff]
      %v349 = vld [vmem:[%s240 + $0xc2] sm:$0xff]
      %v350 = vld [vmem:[%s240 + $0xca] sm:$0xff]
      %v351 = vld [vmem:[%s240 + $0xda] sm:$0xff]
      %v352 = vld [vmem:[%s240 + $0xe2] sm:$0xff]
      %v353 = vld [vmem:[%s240 + $0xf2] sm:$0xff]
      %v354 = vld [vmem:[%s240 + $0xfa] sm:$0xff]
      %v355 = vld [vmem:[%s240 + $0x10a] sm:$0xff]
      %v356 = vld [vmem:[%s240 + $0x112] sm:$0xff]
      %v357 = vld [vmem:[%s240 + $0x122] sm:$0xff]
      %v358 = vld [vmem:[%s240 + $0x12a] sm:$0xff]
      %v359 = vld [vmem:[%s240 + $0x13a] sm:$0xff]
      %v360 = vld [vmem:[%s240 + $0x142] sm:$0xff]
      %v361 = vld [vmem:[%s240 + $0x152] sm:$0xff]
      %v362 = vld [vmem:[%s240 + $0x15a] sm:$0xff]
      %v363 = vld [vmem:[%s240 + $0x16a] sm:$0xff]
      %v364 = vld [vmem:[%s240 + $0x172] sm:$0xff]
      %s365 = scalar_lea.vmem %s240, 24
      %v366 = vld [vmem:[%s365] sm:$0xff]
      %v367 = vld [vmem:[%s365 + $0x8] sm:$0xff]
      %v368 = vld [vmem:[%s365 + $0x18] sm:$0xff]
      %v369 = vld [vmem:[%s365 + $0x20] sm:$0xff]
      %v370 = vld [vmem:[%s365 + $0x30] sm:$0xff]
      %v371 = vld [vmem:[%s365 + $0x38] sm:$0xff]
      %v372 = vld [vmem:[%s365 + $0x48] sm:$0xff]
      %v373 = vld [vmem:[%s365 + $0x50] sm:$0xff]
      %v374 = vld [vmem:[%s365 + $0x60] sm:$0xff]
      %v375 = vld [vmem:[%s365 + $0x68] sm:$0xff]
      %v376 = vld [vmem:[%s365 + $0x78] sm:$0xff]
      %v377 = vld [vmem:[%s365 + $0x80] sm:$0xff]
      %v378 = vld [vmem:[%s365 + $0x90] sm:$0xff]
      %v379 = vld [vmem:[%s365 + $0x98] sm:$0xff]
      %v380 = vld [vmem:[%s365 + $0xa8] sm:$0xff]
      %v381 = vld [vmem:[%s365 + $0xb0] sm:$0xff]
      %v382 = vld [vmem:[%s365 + $0xc0] sm:$0xff]
      %v383 = vld [vmem:[%s365 + $0xc8] sm:$0xff]
      %v384 = vld [vmem:[%s365 + $0xd8] sm:$0xff]
      %v385 = vld [vmem:[%s365 + $0xe0] sm:$0xff]
      %v386 = vld [vmem:[%s365 + $0xf0] sm:$0xff]
      %v387 = vld [vmem:[%s365 + $0xf8] sm:$0xff]
      %v388 = vld [vmem:[%s365 + $0x108] sm:$0xff]
      %v389 = vld [vmem:[%s365 + $0x110] sm:$0xff]
      %v390 = vld [vmem:[%s365 + $0x120] sm:$0xff]
      %v391 = vld [vmem:[%s365 + $0x128] sm:$0xff]
      %v392 = vld [vmem:[%s365 + $0x138] sm:$0xff]
      %v393 = vld [vmem:[%s365 + $0x140] sm:$0xff]
      %v394 = vld [vmem:[%s365 + $0x150] sm:$0xff]
      %v395 = vld [vmem:[%s365 + $0x158] sm:$0xff]
      %v396 = vld [vmem:[%s365 + $0x168] sm:$0xff]
      %v397 = vld [vmem:[%s365 + $0x170] sm:$0xff]
      %v398 = vld [vmem:[%s365 + $0x1] sm:$0xff]
      %v399 = vld [vmem:[%s365 + $0x9] sm:$0xff]
      %v400 = vld [vmem:[%s365 + $0x19] sm:$0xff]
      %v401 = vld [vmem:[%s365 + $0x21] sm:$0xff]
      %v402 = vld [vmem:[%s365 + $0x31] sm:$0xff]
      %v403 = vld [vmem:[%s365 + $0x39] sm:$0xff]
      %v404 = vld [vmem:[%s365 + $0x49] sm:$0xff]
      %v405 = vld [vmem:[%s365 + $0x51] sm:$0xff]
      %v406 = vld [vmem:[%s365 + $0x61] sm:$0xff]
      %v407 = vld [vmem:[%s365 + $0x69] sm:$0xff]
      %v408 = vld [vmem:[%s365 + $0x79] sm:$0xff]
      %v409 = vld [vmem:[%s365 + $0x81] sm:$0xff]
      %v410 = vld [vmem:[%s365 + $0x91] sm:$0xff]
      %v411 = vld [vmem:[%s365 + $0x99] sm:$0xff]
      %v412 = vld [vmem:[%s365 + $0xa9] sm:$0xff]
      %v413 = vld [vmem:[%s365 + $0xb1] sm:$0xff]
      %v414 = vld [vmem:[%s365 + $0xc1] sm:$0xff]
      %v415 = vld [vmem:[%s365 + $0xc9] sm:$0xff]
      %v416 = vld [vmem:[%s365 + $0xd9] sm:$0xff]
      %v417 = vld [vmem:[%s365 + $0xe1] sm:$0xff]
      %v418 = vld [vmem:[%s365 + $0xf1] sm:$0xff]
      %v419 = vld [vmem:[%s365 + $0xf9] sm:$0xff]
      %v420 = vld [vmem:[%s365 + $0x109] sm:$0xff]
      %v421 = vld [vmem:[%s365 + $0x111] sm:$0xff]
      %v422 = vld [vmem:[%s365 + $0x121] sm:$0xff]
      %v423 = vld [vmem:[%s365 + $0x129] sm:$0xff]
      %v424 = vld [vmem:[%s365 + $0x139] sm:$0xff]
      %v425 = vld [vmem:[%s365 + $0x141] sm:$0xff]
      %v426 = vld [vmem:[%s365 + $0x151] sm:$0xff]
      %v427 = vld [vmem:[%s365 + $0x159] sm:$0xff]
      %v428 = vld [vmem:[%s365 + $0x169] sm:$0xff]
      %v429 = vld [vmem:[%s365 + $0x171] sm:$0xff]
      %v430 = vld [vmem:[%s365 + $0x2] sm:$0xff]
      %v431 = vld [vmem:[%s365 + $0xa] sm:$0xff]
      %v432 = vld [vmem:[%s365 + $0x1a] sm:$0xff]
      %v433 = vld [vmem:[%s365 + $0x22] sm:$0xff]
      %v434 = vld [vmem:[%s365 + $0x32] sm:$0xff]
      %v435 = vld [vmem:[%s365 + $0x3a] sm:$0xff]
      %v436 = vld [vmem:[%s365 + $0x4a] sm:$0xff]
      %v437 = vld [vmem:[%s365 + $0x52] sm:$0xff]
      %v438 = vld [vmem:[%s365 + $0x62] sm:$0xff]
      %v439 = vld [vmem:[%s365 + $0x6a] sm:$0xff]
      %v440 = vld [vmem:[%s365 + $0x7a] sm:$0xff]
      %v441 = vld [vmem:[%s365 + $0x82] sm:$0xff]
      %v442 = vld [vmem:[%s365 + $0x92] sm:$0xff]
      %v443 = vld [vmem:[%s365 + $0x9a] sm:$0xff]
      %v444 = vld [vmem:[%s365 + $0xaa] sm:$0xff]
      %v445 = vld [vmem:[%s365 + $0xb2] sm:$0xff]
      %v446 = vld [vmem:[%s365 + $0xc2] sm:$0xff]
      %v447 = vld [vmem:[%s365 + $0xca] sm:$0xff]
      %v448 = vld [vmem:[%s365 + $0xda] sm:$0xff]
      %v449 = vld [vmem:[%s365 + $0xe2] sm:$0xff]
      %v450 = vld [vmem:[%s365 + $0xf2] sm:$0xff]
      %v451 = vld [vmem:[%s365 + $0xfa] sm:$0xff]
      %v452 = vld [vmem:[%s365 + $0x10a] sm:$0xff]
      %v453 = vld [vmem:[%s365 + $0x112] sm:$0xff]
      %v454 = vld [vmem:[%s365 + $0x122] sm:$0xff]
      %v455 = vld [vmem:[%s365 + $0x12a] sm:$0xff]
      %v456 = vld [vmem:[%s365 + $0x13a] sm:$0xff]
      %v457 = vld [vmem:[%s365 + $0x142] sm:$0xff]
      %v458 = vld [vmem:[%s365 + $0x152] sm:$0xff]
      %v459 = vld [vmem:[%s365 + $0x15a] sm:$0xff]
      %v460 = vld [vmem:[%s365 + $0x16a] sm:$0xff]
      %v461 = vld [vmem:[%s365 + $0x172] sm:$0xff]
      %s462 = scalar_lea.vmem %s240, 48
      %v463 = vld [vmem:[%s462] sm:$0xff]
      %v464 = vld [vmem:[%s462 + $0x8] sm:$0xff]
      %v465 = vld [vmem:[%s462 + $0x18] sm:$0xff]
      %v466 = vld [vmem:[%s462 + $0x20] sm:$0xff]
      %v467 = vld [vmem:[%s462 + $0x30] sm:$0xff]
      %v468 = vld [vmem:[%s462 + $0x38] sm:$0xff]
      %v469 = vld [vmem:[%s462 + $0x48] sm:$0xff]
      %v470 = vld [vmem:[%s462 + $0x50] sm:$0xff]
      %v471 = vld [vmem:[%s462 + $0x60] sm:$0xff]
      %v472 = vld [vmem:[%s462 + $0x68] sm:$0xff]
      %v473 = vld [vmem:[%s462 + $0x78] sm:$0xff]
      %v474 = vld [vmem:[%s462 + $0x80] sm:$0xff]
      %v475 = vld [vmem:[%s462 + $0x90] sm:$0xff]
      %v476 = vld [vmem:[%s462 + $0x98] sm:$0xff]
      %v477 = vld [vmem:[%s462 + $0xa8] sm:$0xff]
      %v478 = vld [vmem:[%s462 + $0xb0] sm:$0xff]
      %v479 = vld [vmem:[%s462 + $0xc0] sm:$0xff]
      %v480 = vld [vmem:[%s462 + $0xc8] sm:$0xff]
      %v481 = vld [vmem:[%s462 + $0xd8] sm:$0xff]
      %v482 = vld [vmem:[%s462 + $0xe0] sm:$0xff]
      %v483 = vld [vmem:[%s462 + $0xf0] sm:$0xff]
      %v484 = vld [vmem:[%s462 + $0xf8] sm:$0xff]
      %v485 = vld [vmem:[%s462 + $0x108] sm:$0xff]
      %v486 = vld [vmem:[%s462 + $0x110] sm:$0xff]
      %v487 = vld [vmem:[%s462 + $0x120] sm:$0xff]
      %v488 = vld [vmem:[%s462 + $0x128] sm:$0xff]
      %v489 = vld [vmem:[%s462 + $0x138] sm:$0xff]
      %v490 = vld [vmem:[%s462 + $0x140] sm:$0xff]
      %v491 = vld [vmem:[%s462 + $0x150] sm:$0xff]
      %v492 = vld [vmem:[%s462 + $0x158] sm:$0xff]
      %v493 = vld [vmem:[%s462 + $0x168] sm:$0xff]
      %v494 = vld [vmem:[%s462 + $0x170] sm:$0xff]
      %v495 = vld [vmem:[%s462 + $0x1] sm:$0xff]
      %v496 = vld [vmem:[%s462 + $0x9] sm:$0xff]
      %v497 = vld [vmem:[%s462 + $0x19] sm:$0xff]
      %v498 = vld [vmem:[%s462 + $0x21] sm:$0xff]
      %v499 = vld [vmem:[%s462 + $0x31] sm:$0xff]
      %v500 = vld [vmem:[%s462 + $0x39] sm:$0xff]
      %v501 = vld [vmem:[%s462 + $0x49] sm:$0xff]
      %v502 = vld [vmem:[%s462 + $0x51] sm:$0xff]
      %v503 = vld [vmem:[%s462 + $0x61] sm:$0xff]
      %v504 = vld [vmem:[%s462 + $0x69] sm:$0xff]
      %v505 = vld [vmem:[%s462 + $0x79] sm:$0xff]
      %v506 = vld [vmem:[%s462 + $0x81] sm:$0xff]
      %v507 = vld [vmem:[%s462 + $0x91] sm:$0xff]
      %v508 = vld [vmem:[%s462 + $0x99] sm:$0xff]
      %v509 = vld [vmem:[%s462 + $0xa9] sm:$0xff]
      %v510 = vld [vmem:[%s462 + $0xb1] sm:$0xff]
      %v511 = vld [vmem:[%s462 + $0xc1] sm:$0xff]
      %v512 = vld [vmem:[%s462 + $0xc9] sm:$0xff]
      %v513 = vld [vmem:[%s462 + $0xd9] sm:$0xff]
      %v514 = vld [vmem:[%s462 + $0xe1] sm:$0xff]
      %v515 = vld [vmem:[%s462 + $0xf1] sm:$0xff]
      %v516 = vld [vmem:[%s462 + $0xf9] sm:$0xff]
      %v517 = vld [vmem:[%s462 + $0x109] sm:$0xff]
      %v518 = vld [vmem:[%s462 + $0x111] sm:$0xff]
      %v519 = vld [vmem:[%s462 + $0x121] sm:$0xff]
      %v520 = vld [vmem:[%s462 + $0x129] sm:$0xff]
      %v521 = vld [vmem:[%s462 + $0x139] sm:$0xff]
      %v522 = vld [vmem:[%s462 + $0x141] sm:$0xff]
      %v523 = vld [vmem:[%s462 + $0x151] sm:$0xff]
      %v524 = vld [vmem:[%s462 + $0x159] sm:$0xff]
      %v525 = vld [vmem:[%s462 + $0x169] sm:$0xff]
      %v526 = vld [vmem:[%s462 + $0x171] sm:$0xff]
      %v527 = vld [vmem:[%s462 + $0x2] sm:$0xff]
      %v528 = vld [vmem:[%s462 + $0xa] sm:$0xff]
      %v529 = vld [vmem:[%s462 + $0x1a] sm:$0xff]
      %v530 = vld [vmem:[%s462 + $0x22] sm:$0xff]
      %v531 = vld [vmem:[%s462 + $0x32] sm:$0xff]
      %v532 = vld [vmem:[%s462 + $0x3a] sm:$0xff]
      %v533 = vld [vmem:[%s462 + $0x4a] sm:$0xff]
      %v534 = vld [vmem:[%s462 + $0x52] sm:$0xff]
      %v535 = vld [vmem:[%s462 + $0x62] sm:$0xff]
      %v536 = vld [vmem:[%s462 + $0x6a] sm:$0xff]
      %v537 = vld [vmem:[%s462 + $0x7a] sm:$0xff]
      %v538 = vld [vmem:[%s462 + $0x82] sm:$0xff]
      %v539 = vld [vmem:[%s462 + $0x92] sm:$0xff]
      %v540 = vld [vmem:[%s462 + $0x9a] sm:$0xff]
      %v541 = vld [vmem:[%s462 + $0xaa] sm:$0xff]
      %v542 = vld [vmem:[%s462 + $0xb2] sm:$0xff]
      %v543 = vld [vmem:[%s462 + $0xc2] sm:$0xff]
      %v544 = vld [vmem:[%s462 + $0xca] sm:$0xff]
      %v545 = vld [vmem:[%s462 + $0xda] sm:$0xff]
      %v546 = vld [vmem:[%s462 + $0xe2] sm:$0xff]
      %v547 = vld [vmem:[%s462 + $0xf2] sm:$0xff]
      %v548 = vld [vmem:[%s462 + $0xfa] sm:$0xff]
      %v549 = vld [vmem:[%s462 + $0x10a] sm:$0xff]
      %v550 = vld [vmem:[%s462 + $0x112] sm:$0xff]
      %v551 = vld [vmem:[%s462 + $0x122] sm:$0xff]
      %v552 = vld [vmem:[%s462 + $0x12a] sm:$0xff]
      %v553 = vld [vmem:[%s462 + $0x13a] sm:$0xff]
      %v554 = vld [vmem:[%s462 + $0x142] sm:$0xff]
      %v555 = vld [vmem:[%s462 + $0x152] sm:$0xff]
      %v556 = vld [vmem:[%s462 + $0x15a] sm:$0xff]
      %v557 = vld [vmem:[%s462 + $0x16a] sm:$0xff]
      %v558 = vld [vmem:[%s462 + $0x172] sm:$0xff]
      %591 = vrot.lane.b32.xlu0 %v301, 8
      %v592 = vpop.permute.xlu0 %591
      %593 = vrot.lane.b32.xlu0 %v302, 8
      %v594 = vpop.permute.xlu0 %593
      %595 = vrot.lane.b32.xlu0 %v303, 8
      %v596 = vpop.permute.xlu0 %595
      %597 = vrot.lane.b32.xlu0 %v304, 8
      %v598 = vpop.permute.xlu0 %597
      %599 = vrot.lane.b32.xlu0 %v305, 8
      %v600 = vpop.permute.xlu0 %599
      %601 = vrot.lane.b32.xlu0 %v306, 8
      %v602 = vpop.permute.xlu0 %601
      %603 = vrot.lane.b32.xlu0 %v307, 8
      %v604 = vpop.permute.xlu0 %603
      %605 = vrot.lane.b32.xlu0 %v308, 8
      %v606 = vpop.permute.xlu0 %605
      %607 = vrot.lane.b32.xlu0 %v309, 8
      %v608 = vpop.permute.xlu0 %607
      %609 = vrot.lane.b32.xlu0 %v310, 8
      %v610 = vpop.permute.xlu0 %609
      %611 = vrot.lane.b32.xlu0 %v311, 8
      %v612 = vpop.permute.xlu0 %611
      %613 = vrot.lane.b32.xlu0 %v312, 8
      %v614 = vpop.permute.xlu0 %613
      %615 = vrot.lane.b32.xlu0 %v313, 8
      %v616 = vpop.permute.xlu0 %615
      %617 = vrot.lane.b32.xlu0 %v314, 8
      %v618 = vpop.permute.xlu0 %617
      %619 = vrot.lane.b32.xlu0 %v315, 8
      %v620 = vpop.permute.xlu0 %619
      %621 = vrot.lane.b32.xlu0 %v316, 8
      %v622 = vpop.permute.xlu0 %621
      %623 = vrot.lane.b32.xlu0 %v317, 8
      %v624 = vpop.permute.xlu0 %623
      %625 = vrot.lane.b32.xlu0 %v318, 8
      %v626 = vpop.permute.xlu0 %625
      %627 = vrot.lane.b32.xlu0 %v319, 8
      %v628 = vpop.permute.xlu0 %627
      %629 = vrot.lane.b32.xlu0 %v320, 8
      %v630 = vpop.permute.xlu0 %629
      %631 = vrot.lane.b32.xlu0 %v321, 8
      %v632 = vpop.permute.xlu0 %631
      %633 = vrot.lane.b32.xlu0 %v322, 8
      %v634 = vpop.permute.xlu0 %633
      %635 = vrot.lane.b32.xlu0 %v323, 8
      %v636 = vpop.permute.xlu0 %635
      %637 = vrot.lane.b32.xlu0 %v324, 8
      %v638 = vpop.permute.xlu0 %637
      %639 = vrot.lane.b32.xlu0 %v325, 8
      %v640 = vpop.permute.xlu0 %639
      %641 = vrot.lane.b32.xlu0 %v326, 8
      %v642 = vpop.permute.xlu0 %641
      %643 = vrot.lane.b32.xlu0 %v327, 8
      %v644 = vpop.permute.xlu0 %643
      %645 = vrot.lane.b32.xlu0 %v328, 8
      %v646 = vpop.permute.xlu0 %645
      %647 = vrot.lane.b32.xlu0 %v329, 8
      %v648 = vpop.permute.xlu0 %647
      %649 = vrot.lane.b32.xlu0 %v330, 8
      %v650 = vpop.permute.xlu0 %649
      %651 = vrot.lane.b32.xlu0 %v331, 8
      %v652 = vpop.permute.xlu0 %651
      %653 = vrot.lane.b32.xlu0 %v332, 8
      %v654 = vpop.permute.xlu0 %653
      %719 = vrot.lane.b32.xlu0 %v333, 16
      %v720 = vpop.permute.xlu0 %719
      %721 = vrot.lane.b32.xlu0 %v334, 16
      %v722 = vpop.permute.xlu0 %721
      %723 = vrot.lane.b32.xlu0 %v335, 16
      %v724 = vpop.permute.xlu0 %723
      %725 = vrot.lane.b32.xlu0 %v336, 16
      %v726 = vpop.permute.xlu0 %725
      %727 = vrot.lane.b32.xlu0 %v337, 16
      %v728 = vpop.permute.xlu0 %727
      %729 = vrot.lane.b32.xlu0 %v338, 16
      %v730 = vpop.permute.xlu0 %729
      %731 = vrot.lane.b32.xlu0 %v339, 16
      %v732 = vpop.permute.xlu0 %731
      %733 = vrot.lane.b32.xlu0 %v340, 16
      %v734 = vpop.permute.xlu0 %733
      %735 = vrot.lane.b32.xlu0 %v341, 16
      %v736 = vpop.permute.xlu0 %735
      %737 = vrot.lane.b32.xlu0 %v342, 16
      %v738 = vpop.permute.xlu0 %737
      %739 = vrot.lane.b32.xlu0 %v343, 16
      %v740 = vpop.permute.xlu0 %739
      %741 = vrot.lane.b32.xlu0 %v344, 16
      %v742 = vpop.permute.xlu0 %741
      %743 = vrot.lane.b32.xlu0 %v345, 16
      %v744 = vpop.permute.xlu0 %743
      %745 = vrot.lane.b32.xlu0 %v346, 16
      %v746 = vpop.permute.xlu0 %745
      %747 = vrot.lane.b32.xlu0 %v347, 16
      %v748 = vpop.permute.xlu0 %747
      %749 = vrot.lane.b32.xlu0 %v348, 16
      %v750 = vpop.permute.xlu0 %749
      %751 = vrot.lane.b32.xlu0 %v349, 16
      %v752 = vpop.permute.xlu0 %751
      %753 = vrot.lane.b32.xlu0 %v350, 16
      %v754 = vpop.permute.xlu0 %753
      %755 = vrot.lane.b32.xlu0 %v351, 16
      %v756 = vpop.permute.xlu0 %755
      %757 = vrot.lane.b32.xlu0 %v352, 16
      %v758 = vpop.permute.xlu0 %757
      %759 = vrot.lane.b32.xlu0 %v353, 16
      %v760 = vpop.permute.xlu0 %759
      %761 = vrot.lane.b32.xlu0 %v354, 16
      %v762 = vpop.permute.xlu0 %761
      %763 = vrot.lane.b32.xlu0 %v355, 16
      %v764 = vpop.permute.xlu0 %763
      %765 = vrot.lane.b32.xlu0 %v356, 16
      %v766 = vpop.permute.xlu0 %765
      %767 = vrot.lane.b32.xlu0 %v357, 16
      %v768 = vpop.permute.xlu0 %767
      %769 = vrot.lane.b32.xlu0 %v358, 16
      %v770 = vpop.permute.xlu0 %769
      %771 = vrot.lane.b32.xlu0 %v359, 16
      %v772 = vpop.permute.xlu0 %771
      %773 = vrot.lane.b32.xlu0 %v360, 16
      %v774 = vpop.permute.xlu0 %773
      %775 = vrot.lane.b32.xlu0 %v361, 16
      %v776 = vpop.permute.xlu0 %775
      %777 = vrot.lane.b32.xlu0 %v362, 16
      %v778 = vpop.permute.xlu0 %777
      %779 = vrot.lane.b32.xlu0 %v363, 16
      %v780 = vpop.permute.xlu0 %779
      %781 = vrot.lane.b32.xlu0 %v364, 16
      %v782 = vpop.permute.xlu0 %781
      %847 = vrot.lane.b32.xlu0 %v366, 24
      %v848 = vpop.permute.xlu0 %847
      %849 = vrot.lane.b32.xlu0 %v367, 24
      %v850 = vpop.permute.xlu0 %849
      %851 = vrot.lane.b32.xlu0 %v368, 24
      %v852 = vpop.permute.xlu0 %851
      %853 = vrot.lane.b32.xlu0 %v369, 24
      %v854 = vpop.permute.xlu0 %853
      %855 = vrot.lane.b32.xlu0 %v370, 24
      %v856 = vpop.permute.xlu0 %855
      %857 = vrot.lane.b32.xlu0 %v371, 24
      %v858 = vpop.permute.xlu0 %857
      %859 = vrot.lane.b32.xlu0 %v372, 24
      %v860 = vpop.permute.xlu0 %859
      %861 = vrot.lane.b32.xlu0 %v373, 24
      %v862 = vpop.permute.xlu0 %861
      %863 = vrot.lane.b32.xlu0 %v374, 24
      %v864 = vpop.permute.xlu0 %863
      %865 = vrot.lane.b32.xlu0 %v375, 24
      %v866 = vpop.permute.xlu0 %865
      %867 = vrot.lane.b32.xlu0 %v376, 24
      %v868 = vpop.permute.xlu0 %867
      %869 = vrot.lane.b32.xlu0 %v377, 24
      %v870 = vpop.permute.xlu0 %869
      %871 = vrot.lane.b32.xlu0 %v378, 24
      %v872 = vpop.permute.xlu0 %871
      %873 = vrot.lane.b32.xlu0 %v379, 24
      %v874 = vpop.permute.xlu0 %873
      %875 = vrot.lane.b32.xlu0 %v380, 24
      %v876 = vpop.permute.xlu0 %875
      %877 = vrot.lane.b32.xlu0 %v381, 24
      %v878 = vpop.permute.xlu0 %877
      %879 = vrot.lane.b32.xlu0 %v382, 24
      %v880 = vpop.permute.xlu0 %879
      %881 = vrot.lane.b32.xlu0 %v383, 24
      %v882 = vpop.permute.xlu0 %881
      %883 = vrot.lane.b32.xlu0 %v384, 24
      %v884 = vpop.permute.xlu0 %883
      %885 = vrot.lane.b32.xlu0 %v385, 24
      %v886 = vpop.permute.xlu0 %885
      %887 = vrot.lane.b32.xlu0 %v386, 24
      %v888 = vpop.permute.xlu0 %887
      %889 = vrot.lane.b32.xlu0 %v387, 24
      %v890 = vpop.permute.xlu0 %889
      %891 = vrot.lane.b32.xlu0 %v388, 24
      %v892 = vpop.permute.xlu0 %891
      %893 = vrot.lane.b32.xlu0 %v389, 24
      %v894 = vpop.permute.xlu0 %893
      %895 = vrot.lane.b32.xlu0 %v390, 24
      %v896 = vpop.permute.xlu0 %895
      %897 = vrot.lane.b32.xlu0 %v391, 24
      %v898 = vpop.permute.xlu0 %897
      %899 = vrot.lane.b32.xlu0 %v392, 24
      %v900 = vpop.permute.xlu0 %899
      %901 = vrot.lane.b32.xlu0 %v393, 24
      %v902 = vpop.permute.xlu0 %901
      %903 = vrot.lane.b32.xlu0 %v394, 24
      %v904 = vpop.permute.xlu0 %903
      %905 = vrot.lane.b32.xlu0 %v395, 24
      %v906 = vpop.permute.xlu0 %905
      %907 = vrot.lane.b32.xlu0 %v396, 24
      %v908 = vpop.permute.xlu0 %907
      %909 = vrot.lane.b32.xlu0 %v397, 24
      %v910 = vpop.permute.xlu0 %909
      %975 = vrot.lane.b32.xlu0 %v398, 32
      %v976 = vpop.permute.xlu0 %975
      %977 = vrot.lane.b32.xlu0 %v399, 32
      %v978 = vpop.permute.xlu0 %977
      %979 = vrot.lane.b32.xlu0 %v400, 32
      %v980 = vpop.permute.xlu0 %979
      %981 = vrot.lane.b32.xlu0 %v401, 32
      %v982 = vpop.permute.xlu0 %981
      %983 = vrot.lane.b32.xlu0 %v402, 32
      %v984 = vpop.permute.xlu0 %983
      %985 = vrot.lane.b32.xlu0 %v403, 32
      %v986 = vpop.permute.xlu0 %985
      %987 = vrot.lane.b32.xlu0 %v404, 32
      %v988 = vpop.permute.xlu0 %987
      %989 = vrot.lane.b32.xlu0 %v405, 32
      %v990 = vpop.permute.xlu0 %989
      %991 = vrot.lane.b32.xlu0 %v406, 32
      %v992 = vpop.permute.xlu0 %991
      %993 = vrot.lane.b32.xlu0 %v407, 32
      %v994 = vpop.permute.xlu0 %993
      %995 = vrot.lane.b32.xlu0 %v408, 32
      %v996 = vpop.permute.xlu0 %995
      %997 = vrot.lane.b32.xlu0 %v409, 32
      %v998 = vpop.permute.xlu0 %997
      %999 = vrot.lane.b32.xlu0 %v410, 32
      %v1000 = vpop.permute.xlu0 %999
      %1001 = vrot.lane.b32.xlu0 %v411, 32
      %v1002 = vpop.permute.xlu0 %1001
      %1003 = vrot.lane.b32.xlu0 %v412, 32
      %v1004 = vpop.permute.xlu0 %1003
      %1005 = vrot.lane.b32.xlu0 %v413, 32
      %v1006 = vpop.permute.xlu0 %1005
      %1007 = vrot.lane.b32.xlu0 %v414, 32
      %v1008 = vpop.permute.xlu0 %1007
      %1009 = vrot.lane.b32.xlu0 %v415, 32
      %v1010 = vpop.permute.xlu0 %1009
      %1011 = vrot.lane.b32.xlu0 %v416, 32
      %v1012 = vpop.permute.xlu0 %1011
      %1013 = vrot.lane.b32.xlu0 %v417, 32
      %v1014 = vpop.permute.xlu0 %1013
      %1015 = vrot.lane.b32.xlu0 %v418, 32
      %v1016 = vpop.permute.xlu0 %1015
      %1017 = vrot.lane.b32.xlu0 %v419, 32
      %v1018 = vpop.permute.xlu0 %1017
      %1019 = vrot.lane.b32.xlu0 %v420, 32
      %v1020 = vpop.permute.xlu0 %1019
      %1021 = vrot.lane.b32.xlu0 %v421, 32
      %v1022 = vpop.permute.xlu0 %1021
      %1023 = vrot.lane.b32.xlu0 %v422, 32
      %v1024 = vpop.permute.xlu0 %1023
      %1025 = vrot.lane.b32.xlu0 %v423, 32
      %v1026 = vpop.permute.xlu0 %1025
      %1027 = vrot.lane.b32.xlu0 %v424, 32
      %v1028 = vpop.permute.xlu0 %1027
      %1029 = vrot.lane.b32.xlu0 %v425, 32
      %v1030 = vpop.permute.xlu0 %1029
      %1031 = vrot.lane.b32.xlu0 %v426, 32
      %v1032 = vpop.permute.xlu0 %1031
      %1033 = vrot.lane.b32.xlu0 %v427, 32
      %v1034 = vpop.permute.xlu0 %1033
      %1035 = vrot.lane.b32.xlu0 %v428, 32
      %v1036 = vpop.permute.xlu0 %1035
      %1037 = vrot.lane.b32.xlu0 %v429, 32
      %v1038 = vpop.permute.xlu0 %1037
      %1103 = vrot.lane.b32.xlu0 %v430, 40
      %v1104 = vpop.permute.xlu0 %1103
      %1105 = vrot.lane.b32.xlu0 %v431, 40
      %v1106 = vpop.permute.xlu0 %1105
      %1107 = vrot.lane.b32.xlu0 %v432, 40
      %v1108 = vpop.permute.xlu0 %1107
      %1109 = vrot.lane.b32.xlu0 %v433, 40
      %v1110 = vpop.permute.xlu0 %1109
      %1111 = vrot.lane.b32.xlu0 %v434, 40
      %v1112 = vpop.permute.xlu0 %1111
      %1113 = vrot.lane.b32.xlu0 %v435, 40
      %v1114 = vpop.permute.xlu0 %1113
      %1115 = vrot.lane.b32.xlu0 %v436, 40
      %v1116 = vpop.permute.xlu0 %1115
      %1117 = vrot.lane.b32.xlu0 %v437, 40
      %v1118 = vpop.permute.xlu0 %1117
      %1119 = vrot.lane.b32.xlu0 %v438, 40
      %v1120 = vpop.permute.xlu0 %1119
      %1121 = vrot.lane.b32.xlu0 %v439, 40
      %v1122 = vpop.permute.xlu0 %1121
      %1123 = vrot.lane.b32.xlu0 %v440, 40
      %v1124 = vpop.permute.xlu0 %1123
      %1125 = vrot.lane.b32.xlu0 %v441, 40
      %v1126 = vpop.permute.xlu0 %1125
      %1127 = vrot.lane.b32.xlu0 %v442, 40
      %v1128 = vpop.permute.xlu0 %1127
      %1129 = vrot.lane.b32.xlu0 %v443, 40
      %v1130 = vpop.permute.xlu0 %1129
      %1131 = vrot.lane.b32.xlu0 %v444, 40
      %v1132 = vpop.permute.xlu0 %1131
      %1133 = vrot.lane.b32.xlu0 %v445, 40
      %v1134 = vpop.permute.xlu0 %1133
      %1135 = vrot.lane.b32.xlu0 %v446, 40
      %v1136 = vpop.permute.xlu0 %1135
      %1137 = vrot.lane.b32.xlu0 %v447, 40
      %v1138 = vpop.permute.xlu0 %1137
      %1139 = vrot.lane.b32.xlu0 %v448, 40
      %v1140 = vpop.permute.xlu0 %1139
      %1141 = vrot.lane.b32.xlu0 %v449, 40
      %v1142 = vpop.permute.xlu0 %1141
      %1143 = vrot.lane.b32.xlu0 %v450, 40
      %v1144 = vpop.permute.xlu0 %1143
      %1145 = vrot.lane.b32.xlu0 %v451, 40
      %v1146 = vpop.permute.xlu0 %1145
      %1147 = vrot.lane.b32.xlu0 %v452, 40
      %v1148 = vpop.permute.xlu0 %1147
      %1149 = vrot.lane.b32.xlu0 %v453, 40
      %v1150 = vpop.permute.xlu0 %1149
      %1151 = vrot.lane.b32.xlu0 %v454, 40
      %v1152 = vpop.permute.xlu0 %1151
      %1153 = vrot.lane.b32.xlu0 %v455, 40
      %v1154 = vpop.permute.xlu0 %1153
      %1155 = vrot.lane.b32.xlu0 %v456, 40
      %v1156 = vpop.permute.xlu0 %1155
      %1157 = vrot.lane.b32.xlu0 %v457, 40
      %v1158 = vpop.permute.xlu0 %1157
      %1159 = vrot.lane.b32.xlu0 %v458, 40
      %v1160 = vpop.permute.xlu0 %1159
      %1161 = vrot.lane.b32.xlu0 %v459, 40
      %v1162 = vpop.permute.xlu0 %1161
      %1163 = vrot.lane.b32.xlu0 %v460, 40
      %v1164 = vpop.permute.xlu0 %1163
      %1165 = vrot.lane.b32.xlu0 %v461, 40
      %v1166 = vpop.permute.xlu0 %1165
      %1231 = vrot.lane.b32.xlu0 %v463, 48
      %v1232 = vpop.permute.xlu0 %1231
      %1233 = vrot.lane.b32.xlu0 %v464, 48
      %v1234 = vpop.permute.xlu0 %1233
      %1235 = vrot.lane.b32.xlu0 %v465, 48
      %v1236 = vpop.permute.xlu0 %1235
      %1237 = vrot.lane.b32.xlu0 %v466, 48
      %v1238 = vpop.permute.xlu0 %1237
      %1239 = vrot.lane.b32.xlu0 %v467, 48
      %v1240 = vpop.permute.xlu0 %1239
      %1241 = vrot.lane.b32.xlu0 %v468, 48
      %v1242 = vpop.permute.xlu0 %1241
      %1243 = vrot.lane.b32.xlu0 %v469, 48
      %v1244 = vpop.permute.xlu0 %1243
      %1245 = vrot.lane.b32.xlu0 %v470, 48
      %v1246 = vpop.permute.xlu0 %1245
      %1247 = vrot.lane.b32.xlu0 %v471, 48
      %v1248 = vpop.permute.xlu0 %1247
      %1249 = vrot.lane.b32.xlu0 %v472, 48
      %v1250 = vpop.permute.xlu0 %1249
      %1251 = vrot.lane.b32.xlu0 %v473, 48
      %v1252 = vpop.permute.xlu0 %1251
      %1253 = vrot.lane.b32.xlu0 %v474, 48
      %v1254 = vpop.permute.xlu0 %1253
      %1255 = vrot.lane.b32.xlu0 %v475, 48
      %v1256 = vpop.permute.xlu0 %1255
      %1257 = vrot.lane.b32.xlu0 %v476, 48
      %v1258 = vpop.permute.xlu0 %1257
      %1259 = vrot.lane.b32.xlu0 %v477, 48
      %v1260 = vpop.permute.xlu0 %1259
      %1261 = vrot.lane.b32.xlu0 %v478, 48
      %v1262 = vpop.permute.xlu0 %1261
      %1263 = vrot.lane.b32.xlu0 %v479, 48
      %v1264 = vpop.permute.xlu0 %1263
      %1265 = vrot.lane.b32.xlu0 %v480, 48
      %v1266 = vpop.permute.xlu0 %1265
      %1267 = vrot.lane.b32.xlu0 %v481, 48
      %v1268 = vpop.permute.xlu0 %1267
      %1269 = vrot.lane.b32.xlu0 %v482, 48
      %v1270 = vpop.permute.xlu0 %1269
      %1271 = vrot.lane.b32.xlu0 %v483, 48
      %v1272 = vpop.permute.xlu0 %1271
      %1273 = vrot.lane.b32.xlu0 %v484, 48
      %v1274 = vpop.permute.xlu0 %1273
      %1275 = vrot.lane.b32.xlu0 %v485, 48
      %v1276 = vpop.permute.xlu0 %1275
      %1277 = vrot.lane.b32.xlu0 %v486, 48
      %v1278 = vpop.permute.xlu0 %1277
      %1279 = vrot.lane.b32.xlu0 %v487, 48
      %v1280 = vpop.permute.xlu0 %1279
      %1281 = vrot.lane.b32.xlu0 %v488, 48
      %v1282 = vpop.permute.xlu0 %1281
      %1283 = vrot.lane.b32.xlu0 %v489, 48
      %v1284 = vpop.permute.xlu0 %1283
      %1285 = vrot.lane.b32.xlu0 %v490, 48
      %v1286 = vpop.permute.xlu0 %1285
      %1287 = vrot.lane.b32.xlu0 %v491, 48
      %v1288 = vpop.permute.xlu0 %1287
      %1289 = vrot.lane.b32.xlu0 %v492, 48
      %v1290 = vpop.permute.xlu0 %1289
      %1291 = vrot.lane.b32.xlu0 %v493, 48
      %v1292 = vpop.permute.xlu0 %1291
      %1293 = vrot.lane.b32.xlu0 %v494, 48
      %v1294 = vpop.permute.xlu0 %1293
      %1359 = vrot.lane.b32.xlu0 %v495, 56
      %v1360 = vpop.permute.xlu0 %1359
      %1361 = vrot.lane.b32.xlu0 %v496, 56
      %v1362 = vpop.permute.xlu0 %1361
      %1363 = vrot.lane.b32.xlu0 %v497, 56
      %v1364 = vpop.permute.xlu0 %1363
      %1365 = vrot.lane.b32.xlu0 %v498, 56
      %v1366 = vpop.permute.xlu0 %1365
      %1367 = vrot.lane.b32.xlu0 %v499, 56
      %v1368 = vpop.permute.xlu0 %1367
      %1369 = vrot.lane.b32.xlu0 %v500, 56
      %v1370 = vpop.permute.xlu0 %1369
      %1371 = vrot.lane.b32.xlu0 %v501, 56
      %v1372 = vpop.permute.xlu0 %1371
      %1373 = vrot.lane.b32.xlu0 %v502, 56
      %v1374 = vpop.permute.xlu0 %1373
      %1375 = vrot.lane.b32.xlu0 %v503, 56
      %v1376 = vpop.permute.xlu0 %1375
      %1377 = vrot.lane.b32.xlu0 %v504, 56
      %v1378 = vpop.permute.xlu0 %1377
      %1379 = vrot.lane.b32.xlu0 %v505, 56
      %v1380 = vpop.permute.xlu0 %1379
      %1381 = vrot.lane.b32.xlu0 %v506, 56
      %v1382 = vpop.permute.xlu0 %1381
      %1383 = vrot.lane.b32.xlu0 %v507, 56
      %v1384 = vpop.permute.xlu0 %1383
      %1385 = vrot.lane.b32.xlu0 %v508, 56
      %v1386 = vpop.permute.xlu0 %1385
      %1387 = vrot.lane.b32.xlu0 %v509, 56
      %v1388 = vpop.permute.xlu0 %1387
      %1389 = vrot.lane.b32.xlu0 %v510, 56
      %v1390 = vpop.permute.xlu0 %1389
      %1391 = vrot.lane.b32.xlu0 %v511, 56
      %v1392 = vpop.permute.xlu0 %1391
      %1393 = vrot.lane.b32.xlu0 %v512, 56
      %v1394 = vpop.permute.xlu0 %1393
      %1395 = vrot.lane.b32.xlu0 %v513, 56
      %v1396 = vpop.permute.xlu0 %1395
      %1397 = vrot.lane.b32.xlu0 %v514, 56
      %v1398 = vpop.permute.xlu0 %1397
      %1399 = vrot.lane.b32.xlu0 %v515, 56
      %v1400 = vpop.permute.xlu0 %1399
      %1401 = vrot.lane.b32.xlu0 %v516, 56
      %v1402 = vpop.permute.xlu0 %1401
      %1403 = vrot.lane.b32.xlu0 %v517, 56
      %v1404 = vpop.permute.xlu0 %1403
      %1405 = vrot.lane.b32.xlu0 %v518, 56
      %v1406 = vpop.permute.xlu0 %1405
      %1407 = vrot.lane.b32.xlu0 %v519, 56
      %v1408 = vpop.permute.xlu0 %1407
      %1409 = vrot.lane.b32.xlu0 %v520, 56
      %v1410 = vpop.permute.xlu0 %1409
      %1411 = vrot.lane.b32.xlu0 %v521, 56
      %v1412 = vpop.permute.xlu0 %1411
      %1413 = vrot.lane.b32.xlu0 %v522, 56
      %v1414 = vpop.permute.xlu0 %1413
      %1415 = vrot.lane.b32.xlu0 %v523, 56
      %v1416 = vpop.permute.xlu0 %1415
      %1417 = vrot.lane.b32.xlu0 %v524, 56
      %v1418 = vpop.permute.xlu0 %1417
      %1419 = vrot.lane.b32.xlu0 %v525, 56
      %v1420 = vpop.permute.xlu0 %1419
      %1421 = vrot.lane.b32.xlu0 %v526, 56
      %v1422 = vpop.permute.xlu0 %1421
      %1487 = vrot.lane.b32.xlu0 %v527, 64
      %v1488 = vpop.permute.xlu0 %1487
      %1489 = vrot.lane.b32.xlu0 %v528, 64
      %v1490 = vpop.permute.xlu0 %1489
      %1491 = vrot.lane.b32.xlu0 %v529, 64
      %v1492 = vpop.permute.xlu0 %1491
      %1493 = vrot.lane.b32.xlu0 %v530, 64
      %v1494 = vpop.permute.xlu0 %1493
      %1495 = vrot.lane.b32.xlu0 %v531, 64
      %v1496 = vpop.permute.xlu0 %1495
      %1497 = vrot.lane.b32.xlu0 %v532, 64
      %v1498 = vpop.permute.xlu0 %1497
      %1499 = vrot.lane.b32.xlu0 %v533, 64
      %v1500 = vpop.permute.xlu0 %1499
      %1501 = vrot.lane.b32.xlu0 %v534, 64
      %v1502 = vpop.permute.xlu0 %1501
      %1503 = vrot.lane.b32.xlu0 %v535, 64
      %v1504 = vpop.permute.xlu0 %1503
      %1505 = vrot.lane.b32.xlu0 %v536, 64
      %v1506 = vpop.permute.xlu0 %1505
      %1507 = vrot.lane.b32.xlu0 %v537, 64
      %v1508 = vpop.permute.xlu0 %1507
      %1509 = vrot.lane.b32.xlu0 %v538, 64
      %v1510 = vpop.permute.xlu0 %1509
      %1511 = vrot.lane.b32.xlu0 %v539, 64
      %v1512 = vpop.permute.xlu0 %1511
      %1513 = vrot.lane.b32.xlu0 %v540, 64
      %v1514 = vpop.permute.xlu0 %1513
      %1515 = vrot.lane.b32.xlu0 %v541, 64
      %v1516 = vpop.permute.xlu0 %1515
      %1517 = vrot.lane.b32.xlu0 %v542, 64
      %v1518 = vpop.permute.xlu0 %1517
      %1519 = vrot.lane.b32.xlu0 %v543, 64
      %v1520 = vpop.permute.xlu0 %1519
      %1521 = vrot.lane.b32.xlu0 %v544, 64
      %v1522 = vpop.permute.xlu0 %1521
      %1523 = vrot.lane.b32.xlu0 %v545, 64
      %v1524 = vpop.permute.xlu0 %1523
      %1525 = vrot.lane.b32.xlu0 %v546, 64
      %v1526 = vpop.permute.xlu0 %1525
      %1527 = vrot.lane.b32.xlu0 %v547, 64
      %v1528 = vpop.permute.xlu0 %1527
      %1529 = vrot.lane.b32.xlu0 %v548, 64
      %v1530 = vpop.permute.xlu0 %1529
      %1531 = vrot.lane.b32.xlu0 %v549, 64
      %v1532 = vpop.permute.xlu0 %1531
      %1533 = vrot.lane.b32.xlu0 %v550, 64
      %v1534 = vpop.permute.xlu0 %1533
      %1535 = vrot.lane.b32.xlu0 %v551, 64
      %v1536 = vpop.permute.xlu0 %1535
      %1537 = vrot.lane.b32.xlu0 %v552, 64
      %v1538 = vpop.permute.xlu0 %1537
      %1539 = vrot.lane.b32.xlu0 %v553, 64
      %v1540 = vpop.permute.xlu0 %1539
      %1541 = vrot.lane.b32.xlu0 %v554, 64
      %v1542 = vpop.permute.xlu0 %1541
      %1543 = vrot.lane.b32.xlu0 %v555, 64
      %v1544 = vpop.permute.xlu0 %1543
      %1545 = vrot.lane.b32.xlu0 %v556, 64
      %v1546 = vpop.permute.xlu0 %1545
      %1547 = vrot.lane.b32.xlu0 %v557, 64
      %v1548 = vpop.permute.xlu0 %1547
      %1549 = vrot.lane.b32.xlu0 %v558, 64
      %v1550 = vpop.permute.xlu0 %1549
      %vm1583 = vcmask 64512
      %v1584 = vsel %vm1583, %v269, %v592
      %v1585 = vsel %vm1583, %v270, %v594
      %v1586 = vsel %vm1583, %v271, %v596
      %v1587 = vsel %vm1583, %v272, %v598
      %v1588 = vsel %vm1583, %v273, %v600
      %v1589 = vsel %vm1583, %v274, %v602
      %v1590 = vsel %vm1583, %v275, %v604
      %v1591 = vsel %vm1583, %v276, %v606
      %v1592 = vsel %vm1583, %v277, %v608
      %v1593 = vsel %vm1583, %v278, %v610
      %v1594 = vsel %vm1583, %v279, %v612
      %v1595 = vsel %vm1583, %v280, %v614
      %v1596 = vsel %vm1583, %v281, %v616
      %v1597 = vsel %vm1583, %v282, %v618
      %v1598 = vsel %vm1583, %v283, %v620
      %v1599 = vsel %vm1583, %v284, %v622
      %v1600 = vsel %vm1583, %v285, %v624
      %v1601 = vsel %vm1583, %v286, %v626
      %v1602 = vsel %vm1583, %v287, %v628
      %v1603 = vsel %vm1583, %v288, %v630
      %v1604 = vsel %vm1583, %v289, %v632
      %v1605 = vsel %vm1583, %v290, %v634
      %v1606 = vsel %vm1583, %v291, %v636
      %v1607 = vsel %vm1583, %v292, %v638
      %v1608 = vsel %vm1583, %v293, %v640
      %v1609 = vsel %vm1583, %v294, %v642
      %v1610 = vsel %vm1583, %v295, %v644
      %v1611 = vsel %vm1583, %v296, %v646
      %v1612 = vsel %vm1583, %v297, %v648
      %v1613 = vsel %vm1583, %v298, %v650
      %v1614 = vsel %vm1583, %v299, %v652
      %v1615 = vsel %vm1583, %v300, %v654
      %vm1616 = vcmask 130048
      %v1617 = vsel %vm1616, %v1584, %v720
      %v1618 = vsel %vm1616, %v1585, %v722
      %v1619 = vsel %vm1616, %v1586, %v724
      %v1620 = vsel %vm1616, %v1587, %v726
      %v1621 = vsel %vm1616, %v1588, %v728
      %v1622 = vsel %vm1616, %v1589, %v730
      %v1623 = vsel %vm1616, %v1590, %v732
      %v1624 = vsel %vm1616, %v1591, %v734
      %v1625 = vsel %vm1616, %v1592, %v736
      %v1626 = vsel %vm1616, %v1593, %v738
      %v1627 = vsel %vm1616, %v1594, %v740
      %v1628 = vsel %vm1616, %v1595, %v742
      %v1629 = vsel %vm1616, %v1596, %v744
      %v1630 = vsel %vm1616, %v1597, %v746
      %v1631 = vsel %vm1616, %v1598, %v748
      %v1632 = vsel %vm1616, %v1599, %v750
      %v1633 = vsel %vm1616, %v1600, %v752
      %v1634 = vsel %vm1616, %v1601, %v754
      %v1635 = vsel %vm1616, %v1602, %v756
      %v1636 = vsel %vm1616, %v1603, %v758
      %v1637 = vsel %vm1616, %v1604, %v760
      %v1638 = vsel %vm1616, %v1605, %v762
      %v1639 = vsel %vm1616, %v1606, %v764
      %v1640 = vsel %vm1616, %v1607, %v766
      %v1641 = vsel %vm1616, %v1608, %v768
      %v1642 = vsel %vm1616, %v1609, %v770
      %v1643 = vsel %vm1616, %v1610, %v772
      %v1644 = vsel %vm1616, %v1611, %v774
      %v1645 = vsel %vm1616, %v1612, %v776
      %v1646 = vsel %vm1616, %v1613, %v778
      %v1647 = vsel %vm1616, %v1614, %v780
      %v1648 = vsel %vm1616, %v1615, %v782
      %vm1649 = vcmask 195584
      %v1650 = vsel %vm1649, %v1617, %v848
      %v1651 = vsel %vm1649, %v1618, %v850
      %v1652 = vsel %vm1649, %v1619, %v852
      %v1653 = vsel %vm1649, %v1620, %v854
      %v1654 = vsel %vm1649, %v1621, %v856
      %v1655 = vsel %vm1649, %v1622, %v858
      %v1656 = vsel %vm1649, %v1623, %v860
      %v1657 = vsel %vm1649, %v1624, %v862
      %v1658 = vsel %vm1649, %v1625, %v864
      %v1659 = vsel %vm1649, %v1626, %v866
      %v1660 = vsel %vm1649, %v1627, %v868
      %v1661 = vsel %vm1649, %v1628, %v870
      %v1662 = vsel %vm1649, %v1629, %v872
      %v1663 = vsel %vm1649, %v1630, %v874
      %v1664 = vsel %vm1649, %v1631, %v876
      %v1665 = vsel %vm1649, %v1632, %v878
      %v1666 = vsel %vm1649, %v1633, %v880
      %v1667 = vsel %vm1649, %v1634, %v882
      %v1668 = vsel %vm1649, %v1635, %v884
      %v1669 = vsel %vm1649, %v1636, %v886
      %v1670 = vsel %vm1649, %v1637, %v888
      %v1671 = vsel %vm1649, %v1638, %v890
      %v1672 = vsel %vm1649, %v1639, %v892
      %v1673 = vsel %vm1649, %v1640, %v894
      %v1674 = vsel %vm1649, %v1641, %v896
      %v1675 = vsel %vm1649, %v1642, %v898
      %v1676 = vsel %vm1649, %v1643, %v900
      %v1677 = vsel %vm1649, %v1644, %v902
      %v1678 = vsel %vm1649, %v1645, %v904
      %v1679 = vsel %vm1649, %v1646, %v906
      %v1680 = vsel %vm1649, %v1647, %v908
      %v1681 = vsel %vm1649, %v1648, %v910
      %vm1682 = vcmask 261120
      %v1683 = vsel %vm1682, %v1650, %v976
      %v1684 = vsel %vm1682, %v1651, %v978
      %v1685 = vsel %vm1682, %v1652, %v980
      %v1686 = vsel %vm1682, %v1653, %v982
      %v1687 = vsel %vm1682, %v1654, %v984
      %v1688 = vsel %vm1682, %v1655, %v986
      %v1689 = vsel %vm1682, %v1656, %v988
      %v1690 = vsel %vm1682, %v1657, %v990
      %v1691 = vsel %vm1682, %v1658, %v992
      %v1692 = vsel %vm1682, %v1659, %v994
      %v1693 = vsel %vm1682, %v1660, %v996
      %v1694 = vsel %vm1682, %v1661, %v998
      %v1695 = vsel %vm1682, %v1662, %v1000
      %v1696 = vsel %vm1682, %v1663, %v1002
      %v1697 = vsel %vm1682, %v1664, %v1004
      %v1698 = vsel %vm1682, %v1665, %v1006
      %v1699 = vsel %vm1682, %v1666, %v1008
      %v1700 = vsel %vm1682, %v1667, %v1010
      %v1701 = vsel %vm1682, %v1668, %v1012
      %v1702 = vsel %vm1682, %v1669, %v1014
      %v1703 = vsel %vm1682, %v1670, %v1016
      %v1704 = vsel %vm1682, %v1671, %v1018
      %v1705 = vsel %vm1682, %v1672, %v1020
      %v1706 = vsel %vm1682, %v1673, %v1022
      %v1707 = vsel %vm1682, %v1674, %v1024
      %v1708 = vsel %vm1682, %v1675, %v1026
      %v1709 = vsel %vm1682, %v1676, %v1028
      %v1710 = vsel %vm1682, %v1677, %v1030
      %v1711 = vsel %vm1682, %v1678, %v1032
      %v1712 = vsel %vm1682, %v1679, %v1034
      %v1713 = vsel %vm1682, %v1680, %v1036
      %v1714 = vsel %vm1682, %v1681, %v1038
      %vm1715 = vcmask 326656
      %v1716 = vsel %vm1715, %v1683, %v1104
      %v1717 = vsel %vm1715, %v1684, %v1106
      %v1718 = vsel %vm1715, %v1685, %v1108
      %v1719 = vsel %vm1715, %v1686, %v1110
      %v1720 = vsel %vm1715, %v1687, %v1112
      %v1721 = vsel %vm1715, %v1688, %v1114
      %v1722 = vsel %vm1715, %v1689, %v1116
      %v1723 = vsel %vm1715, %v1690, %v1118
      %v1724 = vsel %vm1715, %v1691, %v1120
      %v1725 = vsel %vm1715, %v1692, %v1122
      %v1726 = vsel %vm1715, %v1693, %v1124
      %v1727 = vsel %vm1715, %v1694, %v1126
      %v1728 = vsel %vm1715, %v1695, %v1128
      %v1729 = vsel %vm1715, %v1696, %v1130
      %v1730 = vsel %vm1715, %v1697, %v1132
      %v1731 = vsel %vm1715, %v1698, %v1134
      %v1732 = vsel %vm1715, %v1699, %v1136
      %v1733 = vsel %vm1715, %v1700, %v1138
      %v1734 = vsel %vm1715, %v1701, %v1140
      %v1735 = vsel %vm1715, %v1702, %v1142
      %v1736 = vsel %vm1715, %v1703, %v1144
      %v1737 = vsel %vm1715, %v1704, %v1146
      %v1738 = vsel %vm1715, %v1705, %v1148
      %v1739 = vsel %vm1715, %v1706, %v1150
      %v1740 = vsel %vm1715, %v1707, %v1152
      %v1741 = vsel %vm1715, %v1708, %v1154
      %v1742 = vsel %vm1715, %v1709, %v1156
      %v1743 = vsel %vm1715, %v1710, %v1158
      %v1744 = vsel %vm1715, %v1711, %v1160
      %v1745 = vsel %vm1715, %v1712, %v1162
      %v1746 = vsel %vm1715, %v1713, %v1164
      %v1747 = vsel %vm1715, %v1714, %v1166
      %vm1748 = vcmask 392192
      %v1749 = vsel %vm1748, %v1716, %v1232
      %v1750 = vsel %vm1748, %v1717, %v1234
      %v1751 = vsel %vm1748, %v1718, %v1236
      %v1752 = vsel %vm1748, %v1719, %v1238
      %v1753 = vsel %vm1748, %v1720, %v1240
      %v1754 = vsel %vm1748, %v1721, %v1242
      %v1755 = vsel %vm1748, %v1722, %v1244
      %v1756 = vsel %vm1748, %v1723, %v1246
      %v1757 = vsel %vm1748, %v1724, %v1248
      %v1758 = vsel %vm1748, %v1725, %v1250
      %v1759 = vsel %vm1748, %v1726, %v1252
      %v1760 = vsel %vm1748, %v1727, %v1254
      %v1761 = vsel %vm1748, %v1728, %v1256
      %v1762 = vsel %vm1748, %v1729, %v1258
      %v1763 = vsel %vm1748, %v1730, %v1260
      %v1764 = vsel %vm1748, %v1731, %v1262
      %v1765 = vsel %vm1748, %v1732, %v1264
      %v1766 = vsel %vm1748, %v1733, %v1266
      %v1767 = vsel %vm1748, %v1734, %v1268
      %v1768 = vsel %vm1748, %v1735, %v1270
      %v1769 = vsel %vm1748, %v1736, %v1272
      %v1770 = vsel %vm1748, %v1737, %v1274
      %v1771 = vsel %vm1748, %v1738, %v1276
      %v1772 = vsel %vm1748, %v1739, %v1278
      %v1773 = vsel %vm1748, %v1740, %v1280
      %v1774 = vsel %vm1748, %v1741, %v1282
      %v1775 = vsel %vm1748, %v1742, %v1284
      %v1776 = vsel %vm1748, %v1743, %v1286
      %v1777 = vsel %vm1748, %v1744, %v1288
      %v1778 = vsel %vm1748, %v1745, %v1290
      %v1779 = vsel %vm1748, %v1746, %v1292
      %v1780 = vsel %vm1748, %v1747, %v1294
      %vm1781 = vcmask 457728
      %v1782 = vsel %vm1781, %v1749, %v1360
      %v1783 = vsel %vm1781, %v1750, %v1362
      %v1784 = vsel %vm1781, %v1751, %v1364
      %v1785 = vsel %vm1781, %v1752, %v1366
      %v1786 = vsel %vm1781, %v1753, %v1368
      %v1787 = vsel %vm1781, %v1754, %v1370
      %v1788 = vsel %vm1781, %v1755, %v1372
      %v1789 = vsel %vm1781, %v1756, %v1374
      %v1790 = vsel %vm1781, %v1757, %v1376
      %v1791 = vsel %vm1781, %v1758, %v1378
      %v1792 = vsel %vm1781, %v1759, %v1380
      %v1793 = vsel %vm1781, %v1760, %v1382
      %v1794 = vsel %vm1781, %v1761, %v1384
      %v1795 = vsel %vm1781, %v1762, %v1386
      %v1796 = vsel %vm1781, %v1763, %v1388
      %v1797 = vsel %vm1781, %v1764, %v1390
      %v1798 = vsel %vm1781, %v1765, %v1392
      %v1799 = vsel %vm1781, %v1766, %v1394
      %v1800 = vsel %vm1781, %v1767, %v1396
      %v1801 = vsel %vm1781, %v1768, %v1398
      %v1802 = vsel %vm1781, %v1769, %v1400
      %v1803 = vsel %vm1781, %v1770, %v1402
      %v1804 = vsel %vm1781, %v1771, %v1404
      %v1805 = vsel %vm1781, %v1772, %v1406
      %v1806 = vsel %vm1781, %v1773, %v1408
      %v1807 = vsel %vm1781, %v1774, %v1410
      %v1808 = vsel %vm1781, %v1775, %v1412
      %v1809 = vsel %vm1781, %v1776, %v1414
      %v1810 = vsel %vm1781, %v1777, %v1416
      %v1811 = vsel %vm1781, %v1778, %v1418
      %v1812 = vsel %vm1781, %v1779, %v1420
      %v1813 = vsel %vm1781, %v1780, %v1422
      %vm1814 = vcmask 523264
      %v1815 = vsel %vm1814, %v1782, %v1488
      %v1816 = vsel %vm1814, %v1783, %v1490
      %v1817 = vsel %vm1814, %v1784, %v1492
      %v1818 = vsel %vm1814, %v1785, %v1494
      %v1819 = vsel %vm1814, %v1786, %v1496
      %v1820 = vsel %vm1814, %v1787, %v1498
      %v1821 = vsel %vm1814, %v1788, %v1500
      %v1822 = vsel %vm1814, %v1789, %v1502
      %v1823 = vsel %vm1814, %v1790, %v1504
      %v1824 = vsel %vm1814, %v1791, %v1506
      %v1825 = vsel %vm1814, %v1792, %v1508
      %v1826 = vsel %vm1814, %v1793, %v1510
      %v1827 = vsel %vm1814, %v1794, %v1512
      %v1828 = vsel %vm1814, %v1795, %v1514
      %v1829 = vsel %vm1814, %v1796, %v1516
      %v1830 = vsel %vm1814, %v1797, %v1518
      %v1831 = vsel %vm1814, %v1798, %v1520
      %v1832 = vsel %vm1814, %v1799, %v1522
      %v1833 = vsel %vm1814, %v1800, %v1524
      %v1834 = vsel %vm1814, %v1801, %v1526
      %v1835 = vsel %vm1814, %v1802, %v1528
      %v1836 = vsel %vm1814, %v1803, %v1530
      %v1837 = vsel %vm1814, %v1804, %v1532
      %v1838 = vsel %vm1814, %v1805, %v1534
      %v1839 = vsel %vm1814, %v1806, %v1536
      %v1840 = vsel %vm1814, %v1807, %v1538
      %v1841 = vsel %vm1814, %v1808, %v1540
      %v1842 = vsel %vm1814, %v1809, %v1542
      %v1843 = vsel %vm1814, %v1810, %v1544
      %v1844 = vsel %vm1814, %v1811, %v1546
      %v1845 = vsel %vm1814, %v1812, %v1548
      %v1846 = vsel %vm1814, %v1813, %v1550
      %v1847 = vld [vmem:[%s244] sm:$0xff]
      %v1848 = vld [vmem:[%s244 + $0x8] sm:$0xff]
      %v1849 = vld [vmem:[%s244 + $0x10] sm:$0xff]
      %v1850 = vld [vmem:[%s244 + $0x18] sm:$0xff]
      %v1851 = vld [vmem:[%s244 + $0x20] sm:$0xff]
      %v1852 = vld [vmem:[%s244 + $0x28] sm:$0xff]
      %v1853 = vld [vmem:[%s244 + $0x30] sm:$0xff]
      %v1854 = vld [vmem:[%s244 + $0x38] sm:$0xff]
      %v1855 = vld [vmem:[%s244 + $0x40] sm:$0xff]
      %vm1856 = vcmask 588800
      %v1858 = vsel %vm1856, %v1815, 0
      %v1861 = vsel %vm1856, %v1816, 0
      %v1864 = vsel %vm1856, %v1817, 0
      %v1867 = vsel %vm1856, %v1818, 0
      %v1870 = vsel %vm1856, %v1819, 0
      %v1873 = vsel %vm1856, %v1820, 0
      %v1876 = vsel %vm1856, %v1821, 0
      %v1879 = vsel %vm1856, %v1822, 0
      %v1882 = vsel %vm1856, %v1823, 0
      %v1885 = vsel %vm1856, %v1824, 0
      %v1888 = vsel %vm1856, %v1825, 0
      %v1891 = vsel %vm1856, %v1826, 0
      %v1894 = vsel %vm1856, %v1827, 0
      %v1897 = vsel %vm1856, %v1828, 0
      %v1900 = vsel %vm1856, %v1829, 0
      %v1903 = vsel %vm1856, %v1830, 0
      %v1906 = vsel %vm1856, %v1831, 0
      %v1909 = vsel %vm1856, %v1832, 0
      %v1912 = vsel %vm1856, %v1833, 0
      %v1915 = vsel %vm1856, %v1834, 0
      %v1918 = vsel %vm1856, %v1835, 0
      %v1921 = vsel %vm1856, %v1836, 0
      %v1924 = vsel %vm1856, %v1837, 0
      %v1927 = vsel %vm1856, %v1838, 0
      %v1930 = vsel %vm1856, %v1839, 0
      %v1933 = vsel %vm1856, %v1840, 0
      %v1936 = vsel %vm1856, %v1841, 0
      %v1939 = vsel %vm1856, %v1842, 0
      %v1942 = vsel %vm1856, %v1843, 0
      %v1945 = vsel %vm1856, %v1844, 0
      %v1948 = vsel %vm1856, %v1845, 0
      %v1951 = vsel %vm1856, %v1846, 0
      %1953 = vmatpush.msra.mxu0 0.0
      %1954 = vmatpush.msra.mxu0 0.0
      %1955 = vmatpush.msra.mxu0 0.0
      %1956 = vmatpush.msra.mxu0 0.0
      %1957 = vmatpush.msra.mxu0 0.0
      %1958 = vmatpush.msra.mxu0 0.0
      %1959 = vmatpush.msra.mxu0 0.0
      %1960 = vmatpush.msra.mxu0 %v1855
      %1961 = vmatpush.msra.mxu0 %v1854
      %1962 = vmatpush.msra.mxu0 %v1853
      %1963 = vmatpush.msra.mxu0 %v1852
      %1964 = vmatpush.msra.mxu0 %v1851
      %1965 = vmatpush.msra.mxu0 %v1850
      %1966 = vmatpush.msra.mxu0 %v1849
      %1967 = vmatpush.msra.mxu0 %v1848
      %1968 = vmatpush.msra.mxu0 %v1847
      %1969 = vmatmul.f32.gmra.mxu0 %v1858
      %v1970 = vpop.f32.mrf.mxu0
      %v1971 = vadd.f32 0.0, %v1970
      %1972 = vmatmul.f32.gmra.mxu0 %v1861
      %v1973 = vpop.f32.mrf.mxu0
      %v1974 = vadd.f32 0.0, %v1973
      %1975 = vmatmul.f32.gmra.mxu0 %v1864
      %v1976 = vpop.f32.mrf.mxu0
      %v1977 = vadd.f32 0.0, %v1976
      %1978 = vmatmul.f32.gmra.mxu0 %v1867
      %v1979 = vpop.f32.mrf.mxu0
      %v1980 = vadd.f32 0.0, %v1979
      %1981 = vmatmul.f32.gmra.mxu0 %v1870
      %v1982 = vpop.f32.mrf.mxu0
      %v1983 = vadd.f32 0.0, %v1982
      %1984 = vmatmul.f32.gmra.mxu0 %v1873
      %v1985 = vpop.f32.mrf.mxu0
      %v1986 = vadd.f32 0.0, %v1985
      %1987 = vmatmul.f32.gmra.mxu0 %v1876
      %v1988 = vpop.f32.mrf.mxu0
      %v1989 = vadd.f32 0.0, %v1988
      %1990 = vmatmul.f32.gmra.mxu0 %v1879
      %v1991 = vpop.f32.mrf.mxu0
      %v1992 = vadd.f32 0.0, %v1991
      %1993 = vmatmul.f32.gmra.mxu0 %v1882
      %v1994 = vpop.f32.mrf.mxu0
      %v1995 = vadd.f32 0.0, %v1994
      %1996 = vmatmul.f32.gmra.mxu0 %v1885
      %v1997 = vpop.f32.mrf.mxu0
      %v1998 = vadd.f32 0.0, %v1997
      %1999 = vmatmul.f32.gmra.mxu0 %v1888
      %v2000 = vpop.f32.mrf.mxu0
      %v2001 = vadd.f32 0.0, %v2000
      %2002 = vmatmul.f32.gmra.mxu0 %v1891
      %v2003 = vpop.f32.mrf.mxu0
      %v2004 = vadd.f32 0.0, %v2003
      %2005 = vmatmul.f32.gmra.mxu0 %v1894
      %v2006 = vpop.f32.mrf.mxu0
      %v2007 = vadd.f32 0.0, %v2006
      %2008 = vmatmul.f32.gmra.mxu0 %v1897
      %v2009 = vpop.f32.mrf.mxu0
      %v2010 = vadd.f32 0.0, %v2009
      %2011 = vmatmul.f32.gmra.mxu0 %v1900
      %v2012 = vpop.f32.mrf.mxu0
      %v2013 = vadd.f32 0.0, %v2012
      %2014 = vmatmul.f32.gmra.mxu0 %v1903
      %v2015 = vpop.f32.mrf.mxu0
      %v2016 = vadd.f32 0.0, %v2015
      %2017 = vmatmul.f32.gmra.mxu0 %v1906
      %v2018 = vpop.f32.mrf.mxu0
      %v2019 = vadd.f32 0.0, %v2018
      %2020 = vmatmul.f32.gmra.mxu0 %v1909
      %v2021 = vpop.f32.mrf.mxu0
      %v2022 = vadd.f32 0.0, %v2021
      %2023 = vmatmul.f32.gmra.mxu0 %v1912
      %v2024 = vpop.f32.mrf.mxu0
      %v2025 = vadd.f32 0.0, %v2024
      %2026 = vmatmul.f32.gmra.mxu0 %v1915
      %v2027 = vpop.f32.mrf.mxu0
      %v2028 = vadd.f32 0.0, %v2027
      %2029 = vmatmul.f32.gmra.mxu0 %v1918
      %v2030 = vpop.f32.mrf.mxu0
      %v2031 = vadd.f32 0.0, %v2030
      %2032 = vmatmul.f32.gmra.mxu0 %v1921
      %v2033 = vpop.f32.mrf.mxu0
      %v2034 = vadd.f32 0.0, %v2033
      %2035 = vmatmul.f32.gmra.mxu0 %v1924
      %v2036 = vpop.f32.mrf.mxu0
      %v2037 = vadd.f32 0.0, %v2036
      %2038 = vmatmul.f32.gmra.mxu0 %v1927
      %v2039 = vpop.f32.mrf.mxu0
      %v2040 = vadd.f32 0.0, %v2039
      %2041 = vmatmul.f32.gmra.mxu0 %v1930
      %v2042 = vpop.f32.mrf.mxu0
      %v2043 = vadd.f32 0.0, %v2042
      %2044 = vmatmul.f32.gmra.mxu0 %v1933
      %v2045 = vpop.f32.mrf.mxu0
      %v2046 = vadd.f32 0.0, %v2045
      %2047 = vmatmul.f32.gmra.mxu0 %v1936
      %v2048 = vpop.f32.mrf.mxu0
      %v2049 = vadd.f32 0.0, %v2048
      %2050 = vmatmul.f32.gmra.mxu0 %v1939
      %v2051 = vpop.f32.mrf.mxu0
      %v2052 = vadd.f32 0.0, %v2051
      %2053 = vmatmul.f32.gmra.mxu0 %v1942
      %v2054 = vpop.f32.mrf.mxu0
      %v2055 = vadd.f32 0.0, %v2054
      %2056 = vmatmul.f32.gmra.mxu0 %v1945
      %v2057 = vpop.f32.mrf.mxu0
      %v2058 = vadd.f32 0.0, %v2057
      %2059 = vmatmul.f32.gmra.mxu0 %v1948
      %v2060 = vpop.f32.mrf.mxu0
      %v2061 = vadd.f32 0.0, %v2060
      %2062 = vmatmul.f32.gmra.mxu0 %v1951
      %v2063 = vpop.f32.mrf.mxu0
      %v2064 = vadd.f32 0.0, %v2063
      %2065 = vdwg.mxu0
      %2066 = vst [vmem:[%s257] sm:$0xff] %v1971
      %2067 = vst [vmem:[%s257 + $0x8] sm:$0xff] %v1974
      %2068 = vst [vmem:[%s257 + $0x10] sm:$0xff] %v1977
      %2069 = vst [vmem:[%s257 + $0x18] sm:$0xff] %v1980
      %2070 = vst [vmem:[%s257 + $0x20] sm:$0xff] %v1983
      %2071 = vst [vmem:[%s257 + $0x28] sm:$0xff] %v1986
      %2072 = vst [vmem:[%s257 + $0x30] sm:$0xff] %v1989
      %2073 = vst [vmem:[%s257 + $0x38] sm:$0xff] %v1992
      %2074 = vst [vmem:[%s257 + $0x40] sm:$0xff] %v1995
      %2075 = vst [vmem:[%s257 + $0x48] sm:$0xff] %v1998
      %2076 = vst [vmem:[%s257 + $0x50] sm:$0xff] %v2001
      %2077 = vst [vmem:[%s257 + $0x58] sm:$0xff] %v2004
      %2078 = vst [vmem:[%s257 + $0x60] sm:$0xff] %v2007
      %2079 = vst [vmem:[%s257 + $0x68] sm:$0xff] %v2010
      %2080 = vst [vmem:[%s257 + $0x70] sm:$0xff] %v2013
      %2081 = vst [vmem:[%s257 + $0x78] sm:$0xff] %v2016
      %2082 = vst [vmem:[%s257 + $0x80] sm:$0xff] %v2019
      %2083 = vst [vmem:[%s257 + $0x88] sm:$0xff] %v2022
      %2084 = vst [vmem:[%s257 + $0x90] sm:$0xff] %v2025
      %2085 = vst [vmem:[%s257 + $0x98] sm:$0xff] %v2028
      %2086 = vst [vmem:[%s257 + $0xa0] sm:$0xff] %v2031
      %2087 = vst [vmem:[%s257 + $0xa8] sm:$0xff] %v2034
      %2088 = vst [vmem:[%s257 + $0xb0] sm:$0xff] %v2037
      %2089 = vst [vmem:[%s257 + $0xb8] sm:$0xff] %v2040
      %2090 = vst [vmem:[%s257 + $0xc0] sm:$0xff] %v2043
      %2091 = vst [vmem:[%s257 + $0xc8] sm:$0xff] %v2046
      %2092 = vst [vmem:[%s257 + $0xd0] sm:$0xff] %v2049
      %2093 = vst [vmem:[%s257 + $0xd8] sm:$0xff] %v2052
      %2094 = vst [vmem:[%s257 + $0xe0] sm:$0xff] %v2055
      %2095 = vst [vmem:[%s257 + $0xe8] sm:$0xff] %v2058
      %2096 = vst [vmem:[%s257 + $0xf0] sm:$0xff] %v2061
      %2097 = vst [vmem:[%s257 + $0xf8] sm:$0xff] %v2064
      %v2098 = vadd.f32 %v1971, %v1974
      %v2099 = vadd.f32 %v2098, %v1977
      %v2100 = vadd.f32 %v2099, %v1980
      %v2101 = vadd.f32 %v2100, %v1983
      %v2102 = vadd.f32 %v2101, %v1986
      %v2103 = vadd.f32 %v2102, %v1989
      %v2104 = vadd.f32 %v2103, %v1992
      %v2105 = vadd.f32 %v2104, %v1995
      %v2106 = vadd.f32 %v2105, %v1998
      %v2107 = vadd.f32 %v2106, %v2001
      %v2108 = vadd.f32 %v2107, %v2004
      %v2109 = vadd.f32 %v2108, %v2007
      %v2110 = vadd.f32 %v2109, %v2010
      %v2111 = vadd.f32 %v2110, %v2013
      %v2112 = vadd.f32 %v2111, %v2016
      %v2113 = vadd.f32 %v2112, %v2019
      %v2114 = vadd.f32 %v2113, %v2022
      %v2115 = vadd.f32 %v2114, %v2025
      %v2116 = vadd.f32 %v2115, %v2028
      %v2117 = vadd.f32 %v2116, %v2031
      %v2118 = vadd.f32 %v2117, %v2034
      %v2119 = vadd.f32 %v2118, %v2037
      %v2120 = vadd.f32 %v2119, %v2040
      %v2121 = vadd.f32 %v2120, %v2043
      %v2122 = vadd.f32 %v2121, %v2046
      %v2123 = vadd.f32 %v2122, %v2049
      %v2124 = vadd.f32 %v2123, %v2052
      %v2125 = vadd.f32 %v2124, %v2055
      %v2126 = vadd.f32 %v2125, %v2058
      %v2127 = vadd.f32 %v2126, %v2061
      %v2128 = vadd.f32 %v2127, %v2064
      %v2129 = vrot.slane %v2128, 4
      %v2130 = vadd.f32 %v2128, %v2129
      %v2131 = vrot.slane %v2130, 2
      %v2132 = vadd.f32 %v2130, %v2131
      %v2133 = vrot.slane %v2132, 1
      %v2134 = vadd.f32 %v2132, %v2133
      %2135 = vst [vmem:[%s268] sm:$0x1] %v2134
      %v2136 = vmul.f32 %v1971, %v1971
      %v2137 = vmul.f32 %v1974, %v1974
      %v2138 = vmul.f32 %v1977, %v1977
      %v2139 = vmul.f32 %v1980, %v1980
      %v2140 = vmul.f32 %v1983, %v1983
      %v2141 = vmul.f32 %v1986, %v1986
      %v2142 = vmul.f32 %v1989, %v1989
      %v2143 = vmul.f32 %v1992, %v1992
      %v2144 = vmul.f32 %v1995, %v1995
      %v2145 = vmul.f32 %v1998, %v1998
      %v2146 = vmul.f32 %v2001, %v2001
      %v2147 = vmul.f32 %v2004, %v2004
      %v2148 = vmul.f32 %v2007, %v2007
      %v2149 = vmul.f32 %v2010, %v2010
      %v2150 = vmul.f32 %v2013, %v2013
      %v2151 = vmul.f32 %v2016, %v2016
      %v2152 = vmul.f32 %v2019, %v2019
      %v2153 = vmul.f32 %v2022, %v2022
      %v2154 = vmul.f32 %v2025, %v2025
      %v2155 = vmul.f32 %v2028, %v2028
      %v2156 = vmul.f32 %v2031, %v2031
      %v2157 = vmul.f32 %v2034, %v2034
      %v2158 = vmul.f32 %v2037, %v2037
      %v2159 = vmul.f32 %v2040, %v2040
      %v2160 = vmul.f32 %v2043, %v2043
      %v2161 = vmul.f32 %v2046, %v2046
      %v2162 = vmul.f32 %v2049, %v2049
      %v2163 = vmul.f32 %v2052, %v2052
      %v2164 = vmul.f32 %v2055, %v2055
      %v2165 = vmul.f32 %v2058, %v2058
      %v2166 = vmul.f32 %v2061, %v2061
      %v2167 = vmul.f32 %v2064, %v2064
      %v2168 = vadd.f32 %v2136, %v2137
      %v2169 = vadd.f32 %v2168, %v2138
      %v2170 = vadd.f32 %v2169, %v2139
      %v2171 = vadd.f32 %v2170, %v2140
      %v2172 = vadd.f32 %v2171, %v2141
      %v2173 = vadd.f32 %v2172, %v2142
      %v2174 = vadd.f32 %v2173, %v2143
      %v2175 = vadd.f32 %v2174, %v2144
      %v2176 = vadd.f32 %v2175, %v2145
      %v2177 = vadd.f32 %v2176, %v2146
      %v2178 = vadd.f32 %v2177, %v2147
      %v2179 = vadd.f32 %v2178, %v2148
      %v2180 = vadd.f32 %v2179, %v2149
      %v2181 = vadd.f32 %v2180, %v2150
      %v2182 = vadd.f32 %v2181, %v2151
      %v2183 = vadd.f32 %v2182, %v2152
      %v2184 = vadd.f32 %v2183, %v2153
      %v2185 = vadd.f32 %v2184, %v2154
      %v2186 = vadd.f32 %v2185, %v2155
      %v2187 = vadd.f32 %v2186, %v2156
      %v2188 = vadd.f32 %v2187, %v2157
      %v2189 = vadd.f32 %v2188, %v2158
      %v2190 = vadd.f32 %v2189, %v2159
      %v2191 = vadd.f32 %v2190, %v2160
      %v2192 = vadd.f32 %v2191, %v2161
      %v2193 = vadd.f32 %v2192, %v2162
      %v2194 = vadd.f32 %v2193, %v2163
      %v2195 = vadd.f32 %v2194, %v2164
      %v2196 = vadd.f32 %v2195, %v2165
      %v2197 = vadd.f32 %v2196, %v2166
      %v2198 = vadd.f32 %v2197, %v2167
      %v2199 = vrot.slane %v2198, 4
      %v2200 = vadd.f32 %v2198, %v2199
      %v2201 = vrot.slane %v2200, 2
      %v2202 = vadd.f32 %v2200, %v2201
      %v2203 = vrot.slane %v2202, 1
      %v2204 = vadd.f32 %v2202, %v2203
      %2205 = vst [vmem:[%s268 + $0x1] sm:$0x1] %v2204
      %s2206 = smul.u32 16, %s21
      %p2207 = scmp.lt.s32.totalorder %s20, 1
      %s2208 = scalar_select %p2207, %s20, 1
      %p2209 = scmp.lt.s32.totalorder %s2206, 15
      %s2210 = scalar_select %p2209, %s2206, 15
      %p2211 = scmp.lt.s32.totalorder %s22, 0
      %s2212 = scalar_select %p2211, %s22, 0
      %s2213 = smul.addr %s2210, 2
      %s2214 = sadd.s32 %s2212, %s2213
      %s2215 = smul.addr %s2208, 32
      %s2216 = sadd.s32 %s2214, %s2215
      %s2217 = smul.addr %s2216, 8
      %s2218 = scalar_lea.vmem %s2, %s2217
      %p2219 = scmp.lt.s32.totalorder %s20, 1
      %s2220 = scalar_select %p2219, %s20, 1
      %p2221 = scmp.lt.s32.totalorder %s21, 0
      %s2222 = scalar_select %p2221, %s21, 0
      %p2223 = scmp.lt.s32.totalorder %s22, 0
      %s2224 = scalar_select %p2223, %s22, 0
      %s2225 = sadd.s32 %s2224, %s2222
      %s2226 = sadd.s32 %s2225, %s2220
      %s2227 = smul.addr %s2226, 2
      %s2228 = scalar_lea.vmem %s3, %s2227
      // Predicated region
      $region29: #{conv_bn_relu.2} parent=27 // pred_check
        %p2229 = pneg %p110
      $region30: #{conv_bn_relu.2} parent=27 // pred_check_branch
        %2231 = sbr.rel (%p2229) target = $region32
      $region31: #{conv_bn_relu.2} parent=27 // pred_region
        %s2232 = smul.u32 16, %s21
      $region32: #{conv_bn_relu.2} parent=27 // pred_fallthru
        _
      // Predicated region
      $region33: #{conv_bn_relu.2} parent=27 // pred_check
        %p2233 = pneg %p140
      $region34: #{conv_bn_relu.2} parent=27 // pred_check_branch
        %2235 = sbr.rel (%p2233) target = $region36
      $region35: #{conv_bn_relu.2} parent=27 // pred_region
        _
      $region36: #{conv_bn_relu.2} parent=27 // pred_fallthru
        _
    $region28: #{conv_bn_relu.2} parent=5 // pred_fallthru
      _
    %p2236 = scmp.le.s32.totalorder 2, %s10
    // Predicated region
    $region37: #{conv_bn_relu.2} parent=5 // pred_check
      %p2237 = pneg %p2236
    $region38: #{conv_bn_relu.2} parent=5 // pred_check_branch
      %2239 = sbr.rel (%p2237) target = $region40
    $region39: #{conv_bn_relu.2} parent=5 // pred_region
      %s2240 = ssub.s32 %s10, 2
      // Predicated region
      $region41: #{conv_bn_relu.2} parent=39 // pred_check
        %p2241 = pneg %p116
      $region42: #{conv_bn_relu.2} parent=39 // pred_check_branch
        %2243 = sbr.rel (%p2241) target = $region44
      $region43: #{conv_bn_relu.2} parent=39 // pred_region
        %s2244 = smul.u32 16, %s24
        %p2245 = scmp.lt.s32.totalorder %s23, 1
        %s2246 = scalar_select %p2245, %s23, 1
        %p2247 = scmp.lt.s32.totalorder %s2244, 15
        %s2248 = scalar_select %p2247, %s2244, 15
        %p2249 = scmp.lt.s32.totalorder %s25, 0
        %s2250 = scalar_select %p2249, %s25, 0
        %s2251 = smul.addr %s2248, 2
        %s2252 = sadd.s32 %s2250, %s2251
        %s2253 = smul.addr %s2246, 32
        %s2254 = sadd.s32 %s2252, %s2253
        %s2255 = smul.addr %s2254, 8
        %s2256 = scalar_lea.vmem %s2, %s2255
      $region44: #{conv_bn_relu.2} parent=39 // pred_fallthru
        _
      // Predicated region
      $region45: #{conv_bn_relu.2} parent=39 // pred_check
        %p2257 = pneg %p146
      $region46: #{conv_bn_relu.2} parent=39 // pred_check_branch
        %2259 = sbr.rel (%p2257) target = $region48
      $region47: #{conv_bn_relu.2} parent=39 // pred_region
        %p2260 = scmp.lt.s32.totalorder %s23, 1
        %s2261 = scalar_select %p2260, %s23, 1
        %p2262 = scmp.lt.s32.totalorder %s24, 0
        %s2263 = scalar_select %p2262, %s24, 0
        %p2264 = scmp.lt.s32.totalorder %s25, 0
        %s2265 = scalar_select %p2264, %s25, 0
        %s2266 = sadd.s32 %s2265, %s2263
        %s2267 = sadd.s32 %s2266, %s2261
        %s2268 = smul.addr %s2267, 2
        %s2269 = scalar_lea.vmem %s3, %s2268
      $region48: #{conv_bn_relu.2} parent=39 // pred_fallthru
        _
    $region40: #{conv_bn_relu.2} parent=5 // pred_fallthru
      _
  $region6: #{conv_bn_relu.2} parent=0 // loop_footer
    %s14 = sadd.s32 1, %s10
  $region7: #{conv_bn_relu.2} parent=0 // loop_footer_branch
    %9 = sbr.rel target = $region3
  $region8: #{conv_bn_relu.2} parent=0 // loop_exit
    _

</llo_original>
